<compile_context>
chip_gen: v5e
topology: v5e:2x2
jax: 0.10.0
libtpu: 0.0.40
codegen_flags: <defaults>
</compile_context>

<pallas_src>
import functools

import jax
import jax.numpy as jnp
from jax.experimental import pallas as pl
from jax.experimental.pallas import tpu as pltpu


def noise_adapter_kernel(
    x_ref,                    # (1, HW, C) bf16   one image per grid step
    w_sa1_ref, b_sa1_ref,     # (C, R) bf16, (1, R) f32   spatial-attn conv1 (BN folded)
    w_sa2_ref,                # (R, 1) bf16               spatial-attn conv2 (no bias)
    wb1_ref, bb1_ref,         # (C, R) bf16, (1, R) f32   bottleneck conv1   (BN folded)
    wb2_ref, bb2_ref,         # (9R, R) bf16, (1, R) f32  bottleneck conv3x3 packed (BN folded)
    wb3_ref, bb3_ref,         # (R, C) bf16, (1, C) f32   bottleneck conv3   (BN folded)
    wp_ref, bp_ref,           # (C, 2) bf16, (1, 2) f32   pred Linear
    out_ref,                  # (1, 1, 2) f32             softmax probs for this image
    *, h, w, c, weight_attention):
  r = c // 8
  hw = h * w

  xb = x_ref[0]                                   # (HW, C) bf16
  xf = xb.astype(jnp.float32)

  # --- spatial attention: Conv1x1 -> folded BN -> ReLU -> Conv1x1 -> Sigmoid ---
  a1 = jnp.dot(xb, w_sa1_ref[...], preferred_element_type=jnp.float32)
  a1 = jnp.maximum(a1 + b_sa1_ref[...], 0.0)                      # (HW, R)
  att_logit = jnp.dot(a1.astype(jnp.bfloat16), w_sa2_ref[...],
                      preferred_element_type=jnp.float32)         # (HW, 1)
  att = pl.reciprocal(1.0 + jnp.exp(-att_logit), approx=True)     # sigmoid (EUP)
  x2 = xf * (att * weight_attention)                              # (HW, C) f32
  x2b = x2.astype(jnp.bfloat16)

  # --- bottleneck: Conv1x1 + folded BN + ReLU ---
  t1 = jnp.dot(x2b, wb1_ref[...], preferred_element_type=jnp.float32)
  t1 = jnp.maximum(t1 + bb1_ref[...], 0.0)                        # (HW, R)

  # --- bottleneck: Conv3x3 (padding=1) as one packed (HW,9R)@(9R,R) matmul ---
  # Zero-pad the flat spatial axis by W+1 rows on each side; each tap is a
  # static slice of that buffer.  Out-of-image taps crossing the top/bottom
  # border land in the zero pad automatically; only the kx = +-1 taps need an
  # (HW, 1) column mask (to kill wrap-around into the adjacent image row).
  pad = jnp.zeros((w + 1, r), jnp.float32)
  zpad = jnp.concatenate([pad, t1, pad], axis=0)                  # (HW+2W+2, R)
  col = jax.lax.broadcasted_iota(jnp.int32, (hw, 1), 0) % w       # x coordinate
  ok_left = col >= 1                                              # valid for kx = -1
  ok_right = col < (w - 1)                                        # valid for kx = +1
  taps = []
  for ky in (-1, 0, 1):
    for kx in (-1, 0, 1):
      start = (w + 1) + ky * w + kx                               # python int (static)
      tap = zpad[start:start + hw, :]                             # (HW, R)
      if kx == -1:
        tap = jnp.where(ok_left, tap, 0.0)
      elif kx == 1:
        tap = jnp.where(ok_right, tap, 0.0)
      taps.append(tap)
  tap_mat = jnp.concatenate(taps, axis=1).astype(jnp.bfloat16)    # (HW, 9R)
  t2 = jnp.dot(tap_mat, wb2_ref[...], preferred_element_type=jnp.float32)
  t2 = jnp.maximum(t2 + bb2_ref[...], 0.0)                        # (HW, R)

  # --- bottleneck: Conv1x1 + folded BN, residual add ---
  t3 = jnp.dot(t2.astype(jnp.bfloat16), wb3_ref[...],
               preferred_element_type=jnp.float32) + bb3_ref[...]
  feat = t3 + x2                                                  # (HW, C) f32

  # --- AdaptiveAvgPool2d(1) (fused mean over HW), Linear, softmax ---
  pooled = jnp.mean(feat, axis=0, keepdims=True)                  # (1, C)
  logits = jnp.dot(pooled.astype(jnp.bfloat16), wp_ref[...],
                   preferred_element_type=jnp.float32) + bp_ref[...]
  m = jnp.max(logits, axis=1, keepdims=True)
  e = jnp.exp(logits - m)
  p = e / jnp.sum(e, axis=1, keepdims=True)                       # (1, 2)
  out_ref[...] = p.reshape(1, 1, 2)


def fold_params(params):
  """Host-side constant folding: BN scale/bias folded into the preceding conv
  weights/biases; matmul weights cast to bf16 (biases stay f32); 3x3 conv
  weights packed to a single (9R, R) matrix."""
  (w_sa1, sa_s, sa_b, w_sa2,
   wb1, bb1, bn1_s, bn1_b,
   wb2, bb2, bn2_s, bn2_b,
   wb3, bb3, bn3_s, bn3_b,
   wp, bp) = params
  r = wb2.shape[2]
  nine_r = wb2.shape[0] * wb2.shape[1]

  w_sa1f = (w_sa1 * sa_s).astype(jnp.bfloat16)
  b_sa1f = sa_b.astype(jnp.float32)
  w_sa2f = w_sa2.astype(jnp.bfloat16)

  wb1f = (wb1 * bn1_s).astype(jnp.bfloat16)
  bb1f = (bb1 * bn1_s + bn1_b).astype(jnp.float32)

  wb2f = (wb2 * bn2_s.reshape(1, 1, r)).reshape(nine_r, r).astype(jnp.bfloat16)
  bb2f = (bb2 * bn2_s + bn2_b).astype(jnp.float32)

  wb3f = (wb3 * bn3_s).astype(jnp.bfloat16)
  bb3f = (bb3 * bn3_s + bn3_b).astype(jnp.float32)

  wpf = wp.astype(jnp.bfloat16)
  bpf = bp.astype(jnp.float32)

  return [w_sa1f, b_sa1f, w_sa2f,
          wb1f, bb1f,
          wb2f, bb2f,
          wb3f, bb3f,
          wpf, bpf]


def noise_adapter_forward(x_nchw, params, weight_attention=1.0):
  b, c, h, w = x_nchw.shape
  assert c % 8 == 0, "channels must be divisible by the reduction (8)"
  hw = h * w

  # NCHW -> (B, H*W, C); bf16 halves HBM traffic / VMEM residency for x.
  x = jnp.transpose(x_nchw, (0, 2, 3, 1)).reshape(b, hw, c).astype(jnp.bfloat16)
  folded = fold_params(params)

  kernel = functools.partial(noise_adapter_kernel, h=h, w=w, c=c,
                             weight_attention=float(weight_attention))

  # Weights/biases: constant index_map -> fetched once, VMEM-resident.
  weight_specs = [pl.BlockSpec(p.shape, lambda i: (0, 0)) for p in folded]

  out = pl.pallas_call(
      kernel,
      grid=(b,),
      out_shape=jax.ShapeDtypeStruct((b, 1, 2), jnp.float32),
      in_specs=[pl.BlockSpec((1, hw, c), lambda i: (i, 0, 0))] + weight_specs,
      out_specs=pl.BlockSpec((1, 1, 2), lambda i: (i, 0, 0)),
      compiler_params=pltpu.CompilerParams(
          dimension_semantics=("parallel",),      # megacore split over images (v7x)
          vmem_limit_bytes=48 << 20),             # <= 75% of v7x's 64 MiB VMEM
  )(x, *folded)
  return out[:, 0, 0]


def make_params(key, c):
  """Deterministic synthetic parameters (matmul layout, BN as scale/bias)."""
  r = c // 8
  eps = 1e-5
  ks = iter(jax.random.split(key, 32))
  nk = lambda: next(ks)

  def bn_fold(n):
    gamma = 1.0 + 0.1 * jax.random.normal(nk(), (n,), jnp.float32)
    beta = 0.1 * jax.random.normal(nk(), (n,), jnp.float32)
    mean = 0.1 * jax.random.normal(nk(), (n,), jnp.float32)
    var = jax.random.uniform(nk(), (n,), jnp.float32, 0.5, 1.5)
    scale = gamma / jnp.sqrt(var + eps)
    bias = beta - mean * scale
    return scale.reshape(1, n), bias.reshape(1, n)

  w_sa1 = 0.1 * jax.random.normal(nk(), (c, r), jnp.float32)
  sa_s, sa_b = bn_fold(r)
  w_sa2 = 0.1 * jax.random.normal(nk(), (r, 1), jnp.float32)

  wb1 = 0.1 * jax.random.normal(nk(), (c, r), jnp.float32)
  bb1 = 0.05 * jax.random.normal(nk(), (1, r), jnp.float32)
  bn1_s, bn1_b = bn_fold(r)

  wb2 = 0.1 * jax.random.normal(nk(), (9, r, r), jnp.float32)   # [ky*3+kx, in, out]
  bb2 = 0.05 * jax.random.normal(nk(), (1, r), jnp.float32)
  bn2_s, bn2_b = bn_fold(r)

  wb3 = 0.1 * jax.random.normal(nk(), (r, c), jnp.float32)
  bb3 = 0.05 * jax.random.normal(nk(), (1, c), jnp.float32)
  bn3_s, bn3_b = bn_fold(c)

  wp = 0.1 * jax.random.normal(nk(), (c, 2), jnp.float32)
  bp = 0.05 * jax.random.normal(nk(), (1, 2), jnp.float32)

  return [w_sa1, sa_s, sa_b, w_sa2,
          wb1, bb1, bn1_s, bn1_b,
          wb2, bb2, bn2_s, bn2_b,
          wb3, bb3, bn3_s, bn3_b,
          wp, bp]


if __name__ == "__main__":
  key = jax.random.PRNGKey(0)
  kx, kp = jax.random.split(key)
  b, c, h, w = 2, 16, 8, 8          # channels must be divisible by 8 (reduction)
  x = jax.random.normal(kx, (b, c, h, w), jnp.float32)   # PyTorch-style NCHW
  params = make_params(kp, c)

  out = noise_adapter_forward(x, params, weight_attention=1.0)
  out = jax.block_until_ready(out)
  assert out.shape == (b,)
  assert bool(jnp.all(jnp.isfinite(out)))
  assert bool(jnp.all((out > 0.0) & (out < 1.0)))   # softmax[:, 0]
  print("KERNEL_OK")
</pallas_src>

<mosaic_0001>
module attributes {stable_mosaic.version = 11 : i64} {
  func.func @noise_adapter_kernel(%arg0: i32, %arg1: memref<1x64x16xbf16, #tpu.memory_space<vmem>>, %arg2: memref<16x2xbf16, #tpu.memory_space<vmem>>, %arg3: memref<1x2xf32, #tpu.memory_space<vmem>>, %arg4: memref<2x1xbf16, #tpu.memory_space<vmem>>, %arg5: memref<16x2xbf16, #tpu.memory_space<vmem>>, %arg6: memref<1x2xf32, #tpu.memory_space<vmem>>, %arg7: memref<18x2xbf16, #tpu.memory_space<vmem>>, %arg8: memref<1x2xf32, #tpu.memory_space<vmem>>, %arg9: memref<2x16xbf16, #tpu.memory_space<vmem>>, %arg10: memref<1x16xf32, #tpu.memory_space<vmem>>, %arg11: memref<16x2xbf16, #tpu.memory_space<vmem>>, %arg12: memref<1x2xf32, #tpu.memory_space<vmem>>, %arg13: memref<1x1x2xf32, #tpu.memory_space<vmem>>) attributes {dimension_semantics = [#tpu.dimension_semantics<parallel>], iteration_bounds = array<i64: 2>, scalar_prefetch = 0 : i64, scratch_operands = 0 : i64, tpu.core_type = #tpu.core_type<tc>, window_params = [{transform_indices = @transform_0, window_bounds = array<i64: 1, 64, 16>}, {pipeline_mode = #tpu.pipeline_mode<synchronous>, transform_indices = @transform_1, window_bounds = array<i64: 16, 2>}, {pipeline_mode = #tpu.pipeline_mode<synchronous>, transform_indices = @transform_2, window_bounds = array<i64: 1, 2>}, {pipeline_mode = #tpu.pipeline_mode<synchronous>, transform_indices = @transform_3, window_bounds = array<i64: 2, 1>}, {pipeline_mode = #tpu.pipeline_mode<synchronous>, transform_indices = @transform_4, window_bounds = array<i64: 16, 2>}, {pipeline_mode = #tpu.pipeline_mode<synchronous>, transform_indices = @transform_5, window_bounds = array<i64: 1, 2>}, {pipeline_mode = #tpu.pipeline_mode<synchronous>, transform_indices = @transform_6, window_bounds = array<i64: 18, 2>}, {pipeline_mode = #tpu.pipeline_mode<synchronous>, transform_indices = @transform_7, window_bounds = array<i64: 1, 2>}, {pipeline_mode = #tpu.pipeline_mode<synchronous>, transform_indices = @transform_8, window_bounds = array<i64: 2, 16>}, {pipeline_mode = #tpu.pipeline_mode<synchronous>, transform_indices = @transform_9, window_bounds = array<i64: 1, 16>}, {pipeline_mode = #tpu.pipeline_mode<synchronous>, transform_indices = @transform_10, window_bounds = array<i64: 16, 2>}, {pipeline_mode = #tpu.pipeline_mode<synchronous>, transform_indices = @transform_11, window_bounds = array<i64: 1, 2>}, {transform_indices = @transform_12, window_bounds = array<i64: 1, 1, 2>}]} {
    %c0 = arith.constant 0 : index
    %c0_0 = arith.constant 0 : index
    %c0_1 = arith.constant 0 : index
    %0 = vector.load %arg1[%c0, %c0_0, %c0_1] : memref<1x64x16xbf16, #tpu.memory_space<vmem>>, vector<1x64x16xbf16>
    %1 = vector.shape_cast %0 : vector<1x64x16xbf16> to vector<64x16xbf16>
    %2 = arith.extf %1 : vector<64x16xbf16> to vector<64x16xf32>
    %c0_2 = arith.constant 0 : index
    %c0_3 = arith.constant 0 : index
    %3 = vector.load %arg2[%c0_2, %c0_3] : memref<16x2xbf16, #tpu.memory_space<vmem>>, vector<16x2xbf16>
    %cst = arith.constant dense<0.000000e+00> : vector<64x2xf32>
    %4 = tpu.matmul %1, %3, %cst {dimension_numbers = #tpu.dot_dimension_numbers<[1], [0], [0], [1], [0, 0, 1, 1], [], []>} : vector<64x16xbf16>, vector<16x2xbf16>, vector<64x2xf32> -> vector<64x2xf32>
    %c0_4 = arith.constant 0 : index
    %c0_5 = arith.constant 0 : index
    %5 = vector.load %arg3[%c0_4, %c0_5] : memref<1x2xf32, #tpu.memory_space<vmem>>, vector<1x2xf32>
    %6 = vector.broadcast %5 : vector<1x2xf32> to vector<64x2xf32>
    %7 = arith.addf %4, %6 : vector<64x2xf32>
    %cst_6 = arith.constant 0.000000e+00 : f32
    %8 = vector.broadcast %cst_6 : f32 to vector<64x2xf32>
    %9 = arith.maximumf %7, %8 : vector<64x2xf32>
    %10 = arith.truncf %9 : vector<64x2xf32> to vector<64x2xbf16>
    %c0_7 = arith.constant 0 : index
    %c0_8 = arith.constant 0 : index
    %11 = vector.load %arg4[%c0_7, %c0_8] : memref<2x1xbf16, #tpu.memory_space<vmem>>, vector<2x1xbf16>
    %cst_9 = arith.constant dense<0.000000e+00> : vector<64x1xf32>
    %12 = tpu.matmul %10, %11, %cst_9 {dimension_numbers = #tpu.dot_dimension_numbers<[1], [0], [0], [1], [0, 0, 1, 1], [], []>} : vector<64x2xbf16>, vector<2x1xbf16>, vector<64x1xf32> -> vector<64x1xf32>
    %cst_10 = arith.constant 0.000000e+00 : f32
    %13 = vector.broadcast %cst_10 : f32 to vector<64x1xf32>
    %14 = arith.subf %13, %12 : vector<64x1xf32>
    %15 = math.exp %14 : vector<64x1xf32>
    %cst_11 = arith.constant 1.000000e+00 : f32
    %16 = vector.broadcast %cst_11 : f32 to vector<64x1xf32>
    %17 = arith.addf %16, %15 : vector<64x1xf32>
    %18 = tpu.reciprocal %17 {approx = true} : vector<64x1xf32> -> vector<64x1xf32>
    %cst_12 = arith.constant 1.000000e+00 : f32
    %19 = vector.broadcast %cst_12 : f32 to vector<64x1xf32>
    %20 = arith.mulf %18, %19 : vector<64x1xf32>
    %21 = vector.broadcast %20 : vector<64x1xf32> to vector<64x16xf32>
    %22 = arith.mulf %2, %21 : vector<64x16xf32>
    %23 = arith.truncf %22 : vector<64x16xf32> to vector<64x16xbf16>
    %c0_13 = arith.constant 0 : index
    %c0_14 = arith.constant 0 : index
    %24 = vector.load %arg5[%c0_13, %c0_14] : memref<16x2xbf16, #tpu.memory_space<vmem>>, vector<16x2xbf16>
    %cst_15 = arith.constant dense<0.000000e+00> : vector<64x2xf32>
    %25 = tpu.matmul %23, %24, %cst_15 {dimension_numbers = #tpu.dot_dimension_numbers<[1], [0], [0], [1], [0, 0, 1, 1], [], []>} : vector<64x16xbf16>, vector<16x2xbf16>, vector<64x2xf32> -> vector<64x2xf32>
    %c0_16 = arith.constant 0 : index
    %c0_17 = arith.constant 0 : index
    %26 = vector.load %arg6[%c0_16, %c0_17] : memref<1x2xf32, #tpu.memory_space<vmem>>, vector<1x2xf32>
    %27 = vector.broadcast %26 : vector<1x2xf32> to vector<64x2xf32>
    %28 = arith.addf %25, %27 : vector<64x2xf32>
    %cst_18 = arith.constant 0.000000e+00 : f32
    %29 = vector.broadcast %cst_18 : f32 to vector<64x2xf32>
    %30 = arith.maximumf %28, %29 : vector<64x2xf32>
    %cst_19 = arith.constant 0.000000e+00 : f32
    %31 = vector.broadcast %cst_19 : f32 to vector<9x2xf32>
    %32 = tpu.concatenate %31, %30, %31 in 0 : vector<9x2xf32>, vector<64x2xf32>, vector<9x2xf32> -> vector<82x2xf32>
    %33 = tpu.iota {dimensions = array<i32: 0>} : vector<64x1xi32>
    %c8_i32 = arith.constant 8 : i32
    %c0_i32 = arith.constant 0 : i32
    %34 = arith.cmpi eq, %c8_i32, %c0_i32 : i32
    %c1_i32 = arith.constant 1 : i32
    %35 = arith.select %34, %c1_i32, %c8_i32 : i32
    %36 = vector.broadcast %35 : i32 to vector<64x1xi32>
    %37 = arith.remsi %33, %36 : vector<64x1xi32>
    %c0_i32_20 = arith.constant 0 : i32
    %38 = vector.broadcast %c0_i32_20 : i32 to vector<64x1xi32>
    %39 = arith.cmpi ne, %37, %38 : vector<64x1xi32>
    %c0_i32_21 = arith.constant 0 : i32
    %40 = vector.broadcast %c0_i32_21 : i32 to vector<64x1xi32>
    %41 = arith.cmpi slt, %37, %40 : vector<64x1xi32>
    %c0_i32_22 = arith.constant 0 : i32
    %42 = arith.cmpi slt, %35, %c0_i32_22 : i32
    %43 = vector.broadcast %42 : i1 to vector<64x1xi1>
    %44 = vector.broadcast %43 : vector<64x1xi1> to vector<64x1xi1>
    %45 = arith.xori %41, %44 : vector<64x1xi1>
    %46 = arith.andi %45, %39 : vector<64x1xi1>
    %47 = vector.broadcast %35 : i32 to vector<64x1xi32>
    %48 = arith.addi %37, %47 : vector<64x1xi32>
    %49 = arith.select %46, %48, %37 : vector<64x1xi1>, vector<64x1xi32>
    %c1_i32_23 = arith.constant 1 : i32
    %50 = vector.broadcast %c1_i32_23 : i32 to vector<64x1xi32>
    %51 = arith.cmpi sge, %49, %50 : vector<64x1xi32>
    %c7_i32 = arith.constant 7 : i32
    %52 = vector.broadcast %c7_i32 : i32 to vector<64x1xi32>
    %53 = arith.cmpi slt, %49, %52 : vector<64x1xi32>
    %54 = vector.extract_strided_slice %32 {offsets = [0, 0], sizes = [64, 2], strides = [1, 1]} : vector<82x2xf32> to vector<64x2xf32>
    %cst_24 = arith.constant 0.000000e+00 : f32
    %55 = vector.shape_cast %51 : vector<64x1xi1> to vector<64x1xi1>
    %56 = vector.broadcast %55 : vector<64x1xi1> to vector<64x2xi1>
    %57 = vector.broadcast %cst_24 : f32 to vector<64x2xf32>
    %58 = arith.select %56, %54, %57 : vector<64x2xi1>, vector<64x2xf32>
    %59 = vector.extract_strided_slice %32 {offsets = [1, 0], sizes = [64, 2], strides = [1, 1]} : vector<82x2xf32> to vector<64x2xf32>
    %60 = vector.extract_strided_slice %32 {offsets = [2, 0], sizes = [64, 2], strides = [1, 1]} : vector<82x2xf32> to vector<64x2xf32>
    %cst_25 = arith.constant 0.000000e+00 : f32
    %61 = vector.shape_cast %53 : vector<64x1xi1> to vector<64x1xi1>
    %62 = vector.broadcast %61 : vector<64x1xi1> to vector<64x2xi1>
    %63 = vector.broadcast %cst_25 : f32 to vector<64x2xf32>
    %64 = arith.select %62, %60, %63 : vector<64x2xi1>, vector<64x2xf32>
    %65 = vector.extract_strided_slice %32 {offsets = [8, 0], sizes = [64, 2], strides = [1, 1]} : vector<82x2xf32> to vector<64x2xf32>
    %cst_26 = arith.constant 0.000000e+00 : f32
    %66 = vector.shape_cast %51 : vector<64x1xi1> to vector<64x1xi1>
    %67 = vector.broadcast %66 : vector<64x1xi1> to vector<64x2xi1>
    %68 = vector.broadcast %cst_26 : f32 to vector<64x2xf32>
    %69 = arith.select %67, %65, %68 : vector<64x2xi1>, vector<64x2xf32>
    %70 = vector.extract_strided_slice %32 {offsets = [9, 0], sizes = [64, 2], strides = [1, 1]} : vector<82x2xf32> to vector<64x2xf32>
    %71 = vector.extract_strided_slice %32 {offsets = [10, 0], sizes = [64, 2], strides = [1, 1]} : vector<82x2xf32> to vector<64x2xf32>
    %cst_27 = arith.constant 0.000000e+00 : f32
    %72 = vector.shape_cast %53 : vector<64x1xi1> to vector<64x1xi1>
    %73 = vector.broadcast %72 : vector<64x1xi1> to vector<64x2xi1>
    %74 = vector.broadcast %cst_27 : f32 to vector<64x2xf32>
    %75 = arith.select %73, %71, %74 : vector<64x2xi1>, vector<64x2xf32>
    %76 = vector.extract_strided_slice %32 {offsets = [16, 0], sizes = [64, 2], strides = [1, 1]} : vector<82x2xf32> to vector<64x2xf32>
    %cst_28 = arith.constant 0.000000e+00 : f32
    %77 = vector.shape_cast %51 : vector<64x1xi1> to vector<64x1xi1>
    %78 = vector.broadcast %77 : vector<64x1xi1> to vector<64x2xi1>
    %79 = vector.broadcast %cst_28 : f32 to vector<64x2xf32>
    %80 = arith.select %78, %76, %79 : vector<64x2xi1>, vector<64x2xf32>
    %81 = vector.extract_strided_slice %32 {offsets = [17, 0], sizes = [64, 2], strides = [1, 1]} : vector<82x2xf32> to vector<64x2xf32>
    %82 = vector.extract_strided_slice %32 {offsets = [18, 0], sizes = [64, 2], strides = [1, 1]} : vector<82x2xf32> to vector<64x2xf32>
    %cst_29 = arith.constant 0.000000e+00 : f32
    %83 = vector.shape_cast %53 : vector<64x1xi1> to vector<64x1xi1>
    %84 = vector.broadcast %83 : vector<64x1xi1> to vector<64x2xi1>
    %85 = vector.broadcast %cst_29 : f32 to vector<64x2xf32>
    %86 = arith.select %84, %82, %85 : vector<64x2xi1>, vector<64x2xf32>
    %87 = tpu.concatenate %58, %59, %64, %69, %70, %75, %80, %81, %86 in 1 : vector<64x2xf32>, vector<64x2xf32>, vector<64x2xf32>, vector<64x2xf32>, vector<64x2xf32>, vector<64x2xf32>, vector<64x2xf32>, vector<64x2xf32>, vector<64x2xf32> -> vector<64x18xf32>
    %88 = arith.truncf %87 : vector<64x18xf32> to vector<64x18xbf16>
    %c0_30 = arith.constant 0 : index
    %c0_31 = arith.constant 0 : index
    %89 = vector.load %arg7[%c0_30, %c0_31] : memref<18x2xbf16, #tpu.memory_space<vmem>>, vector<18x2xbf16>
    %cst_32 = arith.constant dense<0.000000e+00> : vector<64x2xf32>
    %90 = tpu.matmul %88, %89, %cst_32 {dimension_numbers = #tpu.dot_dimension_numbers<[1], [0], [0], [1], [0, 0, 1, 1], [], []>} : vector<64x18xbf16>, vector<18x2xbf16>, vector<64x2xf32> -> vector<64x2xf32>
    %c0_33 = arith.constant 0 : index
    %c0_34 = arith.constant 0 : index
    %91 = vector.load %arg8[%c0_33, %c0_34] : memref<1x2xf32, #tpu.memory_space<vmem>>, vector<1x2xf32>
    %92 = vector.broadcast %91 : vector<1x2xf32> to vector<64x2xf32>
    %93 = arith.addf %90, %92 : vector<64x2xf32>
    %cst_35 = arith.constant 0.000000e+00 : f32
    %94 = vector.broadcast %cst_35 : f32 to vector<64x2xf32>
    %95 = arith.maximumf %93, %94 : vector<64x2xf32>
    %96 = arith.truncf %95 : vector<64x2xf32> to vector<64x2xbf16>
    %c0_36 = arith.constant 0 : index
    %c0_37 = arith.constant 0 : index
    %97 = vector.load %arg9[%c0_36, %c0_37] : memref<2x16xbf16, #tpu.memory_space<vmem>>, vector<2x16xbf16>
    %cst_38 = arith.constant dense<0.000000e+00> : vector<64x16xf32>
    %98 = tpu.matmul %96, %97, %cst_38 {dimension_numbers = #tpu.dot_dimension_numbers<[1], [0], [0], [1], [0, 0, 1, 1], [], []>} : vector<64x2xbf16>, vector<2x16xbf16>, vector<64x16xf32> -> vector<64x16xf32>
    %c0_39 = arith.constant 0 : index
    %c0_40 = arith.constant 0 : index
    %99 = vector.load %arg10[%c0_39, %c0_40] : memref<1x16xf32, #tpu.memory_space<vmem>>, vector<1x16xf32>
    %100 = vector.broadcast %99 : vector<1x16xf32> to vector<64x16xf32>
    %101 = arith.addf %98, %100 : vector<64x16xf32>
    %102 = arith.addf %101, %22 : vector<64x16xf32>
    %cst_41 = arith.constant dense<0.000000e+00> : vector<16xf32>
    %103 = vector.multi_reduction <add>, %102, %cst_41 [0] : vector<64x16xf32> to vector<16xf32>
    %104 = vector.shape_cast %103 : vector<16xf32> to vector<1x16xf32>
    %cst_42 = arith.constant 6.400000e+01 : f32
    %105 = vector.broadcast %cst_42 : f32 to vector<1x16xf32>
    %106 = arith.divf %104, %105 : vector<1x16xf32>
    %107 = arith.truncf %106 : vector<1x16xf32> to vector<1x16xbf16>
    %c0_43 = arith.constant 0 : index
    %c0_44 = arith.constant 0 : index
    %108 = vector.load %arg11[%c0_43, %c0_44] : memref<16x2xbf16, #tpu.memory_space<vmem>>, vector<16x2xbf16>
    %cst_45 = arith.constant dense<0.000000e+00> : vector<1x2xf32>
    %109 = tpu.matmul %107, %108, %cst_45 {dimension_numbers = #tpu.dot_dimension_numbers<[1], [0], [0], [1], [0, 0, 1, 1], [], []>} : vector<1x16xbf16>, vector<16x2xbf16>, vector<1x2xf32> -> vector<1x2xf32>
    %c0_46 = arith.constant 0 : index
    %c0_47 = arith.constant 0 : index
    %110 = vector.load %arg12[%c0_46, %c0_47] : memref<1x2xf32, #tpu.memory_space<vmem>>, vector<1x2xf32>
    %111 = arith.addf %109, %110 : vector<1x2xf32>
    %cst_48 = arith.constant dense<0xFF800000> : vector<1xf32>
    %112 = vector.multi_reduction <maximumf>, %111, %cst_48 [1] : vector<1x2xf32> to vector<1xf32>
    %113 = vector.shape_cast %112 : vector<1xf32> to vector<1x1xf32>
    %114 = vector.broadcast %113 : vector<1x1xf32> to vector<1x2xf32>
    %115 = arith.subf %111, %114 : vector<1x2xf32>
    %116 = math.exp %115 : vector<1x2xf32>
    %cst_49 = arith.constant dense<0.000000e+00> : vector<1xf32>
    %117 = vector.multi_reduction <add>, %116, %cst_49 [1] : vector<1x2xf32> to vector<1xf32>
    %118 = vector.shape_cast %117 : vector<1xf32> to vector<1x1xf32>
    %119 = vector.broadcast %118 : vector<1x1xf32> to vector<1x2xf32>
    %120 = arith.divf %116, %119 : vector<1x2xf32>
    %121 = vector.shape_cast %120 : vector<1x2xf32> to vector<1x1x2xf32>
    %c0_50 = arith.constant 0 : index
    %c0_51 = arith.constant 0 : index
    %c0_52 = arith.constant 0 : index
    %122 = vector.load %arg13[%c0_50, %c0_51, %c0_52] : memref<1x1x2xf32, #tpu.memory_space<vmem>>, vector<1x1x2xf32>
    tpu.vector_store %arg13[%c0_50, %c0_51, %c0_52], %121 {strides = array<i32>} : memref<1x1x2xf32, #tpu.memory_space<vmem>>, vector<1x1x2xf32>,
    return
  }
  func.func @transform_0(%arg0: i32) -> (i32, i32, i32) {
    %c0_i32 = arith.constant 0 : i32
    %c0_i32_0 = arith.constant 0 : i32
    %c0_i32_1 = arith.constant 0 : i32
    return %arg0, %c0_i32, %c0_i32_0 : i32, i32, i32
  }
  func.func @transform_1(%arg0: i32) -> (i32, i32) {
    %c0_i32 = arith.constant 0 : i32
    %c0_i32_0 = arith.constant 0 : i32
    %c0_i32_1 = arith.constant 0 : i32
    return %c0_i32, %c0_i32_0 : i32, i32
  }
  func.func @transform_2(%arg0: i32) -> (i32, i32) {
    %c0_i32 = arith.constant 0 : i32
    %c0_i32_0 = arith.constant 0 : i32
    %c0_i32_1 = arith.constant 0 : i32
    return %c0_i32, %c0_i32_0 : i32, i32
  }
  func.func @transform_3(%arg0: i32) -> (i32, i32) {
    %c0_i32 = arith.constant 0 : i32
    %c0_i32_0 = arith.constant 0 : i32
    %c0_i32_1 = arith.constant 0 : i32
    return %c0_i32, %c0_i32_0 : i32, i32
  }
  func.func @transform_4(%arg0: i32) -> (i32, i32) {
    %c0_i32 = arith.constant 0 : i32
    %c0_i32_0 = arith.constant 0 : i32
    %c0_i32_1 = arith.constant 0 : i32
    return %c0_i32, %c0_i32_0 : i32, i32
  }
  func.func @transform_5(%arg0: i32) -> (i32, i32) {
    %c0_i32 = arith.constant 0 : i32
    %c0_i32_0 = arith.constant 0 : i32
    %c0_i32_1 = arith.constant 0 : i32
    return %c0_i32, %c0_i32_0 : i32, i32
  }
  func.func @transform_6(%arg0: i32) -> (i32, i32) {
    %c0_i32 = arith.constant 0 : i32
    %c0_i32_0 = arith.constant 0 : i32
    %c0_i32_1 = arith.constant 0 : i32
    return %c0_i32, %c0_i32_0 : i32, i32
  }
  func.func @transform_7(%arg0: i32) -> (i32, i32) {
    %c0_i32 = arith.constant 0 : i32
    %c0_i32_0 = arith.constant 0 : i32
    %c0_i32_1 = arith.constant 0 : i32
    return %c0_i32, %c0_i32_0 : i32, i32
  }
  func.func @transform_8(%arg0: i32) -> (i32, i32) {
    %c0_i32 = arith.constant 0 : i32
    %c0_i32_0 = arith.constant 0 : i32
    %c0_i32_1 = arith.constant 0 : i32
    return %c0_i32, %c0_i32_0 : i32, i32
  }
  func.func @transform_9(%arg0: i32) -> (i32, i32) {
    %c0_i32 = arith.constant 0 : i32
    %c0_i32_0 = arith.constant 0 : i32
    %c0_i32_1 = arith.constant 0 : i32
    return %c0_i32, %c0_i32_0 : i32, i32
  }
  func.func @transform_10(%arg0: i32) -> (i32, i32) {
    %c0_i32 = arith.constant 0 : i32
    %c0_i32_0 = arith.constant 0 : i32
    %c0_i32_1 = arith.constant 0 : i32
    return %c0_i32, %c0_i32_0 : i32, i32
  }
  func.func @transform_11(%arg0: i32) -> (i32, i32) {
    %c0_i32 = arith.constant 0 : i32
    %c0_i32_0 = arith.constant 0 : i32
    %c0_i32_1 = arith.constant 0 : i32
    return %c0_i32, %c0_i32_0 : i32, i32
  }
  func.func @transform_12(%arg0: i32) -> (i32, i32, i32) {
    %c0_i32 = arith.constant 0 : i32
    %c0_i32_0 = arith.constant 0 : i32
    %c0_i32_1 = arith.constant 0 : i32
    return %arg0, %c0_i32, %c0_i32_0 : i32, i32, i32
  }
}

</mosaic_0001>

<llo_original>
// kernel: tpu_custom_call.1
$region0: #{tpu_custom_call.1}
  #allocation0 [shape = 'u32[]', space=smem, size = 0x4, offset = 0x4, fixed_abs, tag = 'smem constant byte address 0x4 - core index']
  #allocation1 [shape = 'u32[72,128]{1,0:T(1,128)}', space=vmem, size = 0x9000, scoped, tag = 'internal scratch']
  %s0 = inlined_call_operand.vmem [shape: bf16[2,64,16], index: 0, kind: input, shape index: {}]
  %s1 = inlined_call_operand.vmem [shape: bf16[16,2], index: 1, kind: input, shape index: {}]
  %s2 = inlined_call_operand.vmem [shape: f32[1,2], index: 2, kind: input, shape index: {}]
  %s3 = inlined_call_operand.vmem [shape: bf16[2,1], index: 3, kind: input, shape index: {}]
  %s4 = inlined_call_operand.vmem [shape: bf16[16,2], index: 4, kind: input, shape index: {}]
  %s5 = inlined_call_operand.vmem [shape: f32[1,2], index: 5, kind: input, shape index: {}]
  %s6 = inlined_call_operand.vmem [shape: bf16[18,2], index: 6, kind: input, shape index: {}]
  %s7 = inlined_call_operand.vmem [shape: f32[1,2], index: 7, kind: input, shape index: {}]
  %s8 = inlined_call_operand.vmem [shape: bf16[2,16], index: 8, kind: input, shape index: {}]
  %s9 = inlined_call_operand.vmem [shape: f32[1,16], index: 9, kind: input, shape index: {}]
  %s10 = inlined_call_operand.vmem [shape: bf16[16,2], index: 10, kind: input, shape index: {}]
  %s11 = inlined_call_operand.vmem [shape: f32[1,2], index: 11, kind: input, shape index: {}]
  %s12 = inlined_call_operand.hbm [shape: f32[2,1,2], index: 12, kind: output, shape index: {}]
  %s13 = sld [smem:[#allocation0]]
  $region81: #{tpu_custom_call.1} parent=0
    _
  %s15 = ssub.s32 1, %s13
  %s16 = scalar_select 0, %s15, %s13
  $region1: #{tpu_custom_call.1} parent=0
    #allocation2 [shape = 'u8[1024]{0}', space=vmem, size = 0x400, scoped, tag = 'output window, operand 0']
    #allocation3 [shape = 's32[2]{0}', space=sflag, size = 0x8, scoped, tag = 'scoped memory for tpu_custom_call.1']
    %17 = vsyncpa [#allocation3], 0
    %s18 = scalar_lea.sflag [#allocation3], 1
    %19 = vsyncpa %s18, 0
    loop: start=0, step=1, limit=4
    $region2: #{tpu_custom_call.1} parent=1 // loop_pre_header
      _
    $region3: #{tpu_custom_call.1} parent=1 // loop_header
      %s21 = sphi 0, %s25
      %p22 = scmp.ge.s32.totalorder %s21, 4
      %s31 = sphi 0, %s33
      %s34 = sphi 0, %s31
      %s35 = sphi 0, %s34
      %s51 = sphi 0, %s35
      %s55 = sphi 0, %s55
      %s57 = sphi 0, %s55
      %s58 = sphi 0, %s57
      %s72 = sphi 0, %s58
      %s76 = sphi 0, %s76
      %s78 = sphi 0, %s76
      %s79 = sphi 0, %s78
      %s93 = sphi 0, %s79
      %s97 = sphi 0, %s97
      %s99 = sphi 0, %s97
      %s100 = sphi 0, %s99
      %s114 = sphi 0, %s100
      %s118 = sphi 0, %s118
      %s120 = sphi 0, %s118
      %s121 = sphi 0, %s120
      %s135 = sphi 0, %s121
      %s139 = sphi 0, %s139
      %s141 = sphi 0, %s139
      %s142 = sphi 0, %s141
      %s156 = sphi 0, %s142
      %s160 = sphi 0, %s160
      %s162 = sphi 0, %s160
      %s163 = sphi 0, %s162
      %s177 = sphi 0, %s163
      %s181 = sphi 0, %s181
      %s183 = sphi 0, %s181
      %s184 = sphi 0, %s183
      %s198 = sphi 0, %s184
      %s202 = sphi 0, %s202
      %s204 = sphi 0, %s202
      %s205 = sphi 0, %s204
      %s219 = sphi 0, %s205
      %s223 = sphi 0, %s223
      %s225 = sphi 0, %s223
      %s226 = sphi 0, %s225
      %s240 = sphi 0, %s226
      %s244 = sphi 0, %s244
      %s246 = sphi 0, %s244
      %s247 = sphi 0, %s246
      %s261 = sphi 0, %s247
      %s265 = sphi 0, %s265
      %s267 = sphi 0, %s265
      %s268 = sphi 0, %s267
      %s282 = sphi 0, %s268
      %s288 = sphi 0, %s290
      %s291 = sphi 0, %s288
      %s292 = sphi 0, %s291
      %s308 = sphi 0, %s292
    $region4: #{tpu_custom_call.1} parent=1 // loop_header_branch
      %24 = sbr.rel (%p22) target = $region8
    $region5: #{tpu_custom_call.1} parent=1 // loop_body
      %s26 = ssub.s32 %s21, 1
      %s27 = ssub.s32 %s21, 2
      %s28 = sadd.s32 %s21, 1
      %s29 = ssub.s32 %s21, %s28
      %p30 = scmp.eq.s32.totalorder %s29, 0
      %s32 = sadd.s32 %s31, 1
      %s33 = scalar_select %p30, %s31, %s32
      %p36 = pneg %p30
      %p37 = scmp.eq.s32.totalorder %s21, 1
      %p38 = por %p36, %p37
      %p39 = scmp.ne.s32.totalorder %s31, %s34
      %p40 = scmp.eq.s32.totalorder %s21, 0
      %p41 = por %p39, %p40
      %p42 = scmp.ne.s32.totalorder %s31, %s34
      %p43 = scmp.eq.s32.totalorder %s26, 1
      %p44 = por %p42, %p43
      %p45 = scmp.ne.s32.totalorder %s34, %s35
      %p46 = scmp.eq.s32.totalorder %s26, 0
      %p47 = por %p45, %p46
      %p48 = scmp.ne.s32.totalorder %s34, %s35
      %p49 = scmp.eq.s32.totalorder %s27, 1
      %p50 = por %p48, %p49
      %p52 = scmp.ne.s32.totalorder %s35, %s51
      %p53 = scmp.eq.s32.totalorder %s27, 0
      %p54 = por %p52, %p53
      %s56 = sadd.s32 %s55, 1
      %p59 = scmp.eq.s32.totalorder %s21, 1
      %p60 = scmp.ne.s32.totalorder %s55, %s57
      %p61 = scmp.eq.s32.totalorder %s21, 0
      %p62 = por %p60, %p61
      %p63 = scmp.ne.s32.totalorder %s55, %s57
      %p64 = scmp.eq.s32.totalorder %s26, 1
      %p65 = por %p63, %p64
      %p66 = scmp.ne.s32.totalorder %s57, %s58
      %p67 = scmp.eq.s32.totalorder %s26, 0
      %p68 = por %p66, %p67
      %p69 = scmp.ne.s32.totalorder %s57, %s58
      %p70 = scmp.eq.s32.totalorder %s27, 1
      %p71 = por %p69, %p70
      %p73 = scmp.ne.s32.totalorder %s58, %s72
      %p74 = scmp.eq.s32.totalorder %s27, 0
      %p75 = por %p73, %p74
      %s77 = sadd.s32 %s76, 1
      %p80 = scmp.eq.s32.totalorder %s21, 1
      %p81 = scmp.ne.s32.totalorder %s76, %s78
      %p82 = scmp.eq.s32.totalorder %s21, 0
      %p83 = por %p81, %p82
      %p84 = scmp.ne.s32.totalorder %s76, %s78
      %p85 = scmp.eq.s32.totalorder %s26, 1
      %p86 = por %p84, %p85
      %p87 = scmp.ne.s32.totalorder %s78, %s79
      %p88 = scmp.eq.s32.totalorder %s26, 0
      %p89 = por %p87, %p88
      %p90 = scmp.ne.s32.totalorder %s78, %s79
      %p91 = scmp.eq.s32.totalorder %s27, 1
      %p92 = por %p90, %p91
      %p94 = scmp.ne.s32.totalorder %s79, %s93
      %p95 = scmp.eq.s32.totalorder %s27, 0
      %p96 = por %p94, %p95
      %s98 = sadd.s32 %s97, 1
      %p101 = scmp.eq.s32.totalorder %s21, 1
      %p102 = scmp.ne.s32.totalorder %s97, %s99
      %p103 = scmp.eq.s32.totalorder %s21, 0
      %p104 = por %p102, %p103
      %p105 = scmp.ne.s32.totalorder %s97, %s99
      %p106 = scmp.eq.s32.totalorder %s26, 1
      %p107 = por %p105, %p106
      %p108 = scmp.ne.s32.totalorder %s99, %s100
      %p109 = scmp.eq.s32.totalorder %s26, 0
      %p110 = por %p108, %p109
      %p111 = scmp.ne.s32.totalorder %s99, %s100
      %p112 = scmp.eq.s32.totalorder %s27, 1
      %p113 = por %p111, %p112
      %p115 = scmp.ne.s32.totalorder %s100, %s114
      %p116 = scmp.eq.s32.totalorder %s27, 0
      %p117 = por %p115, %p116
      %s119 = sadd.s32 %s118, 1
      %p122 = scmp.eq.s32.totalorder %s21, 1
      %p123 = scmp.ne.s32.totalorder %s118, %s120
      %p124 = scmp.eq.s32.totalorder %s21, 0
      %p125 = por %p123, %p124
      %p126 = scmp.ne.s32.totalorder %s118, %s120
      %p127 = scmp.eq.s32.totalorder %s26, 1
      %p128 = por %p126, %p127
      %p129 = scmp.ne.s32.totalorder %s120, %s121
      %p130 = scmp.eq.s32.totalorder %s26, 0
      %p131 = por %p129, %p130
      %p132 = scmp.ne.s32.totalorder %s120, %s121
      %p133 = scmp.eq.s32.totalorder %s27, 1
      %p134 = por %p132, %p133
      %p136 = scmp.ne.s32.totalorder %s121, %s135
      %p137 = scmp.eq.s32.totalorder %s27, 0
      %p138 = por %p136, %p137
      %s140 = sadd.s32 %s139, 1
      %p143 = scmp.eq.s32.totalorder %s21, 1
      %p144 = scmp.ne.s32.totalorder %s139, %s141
      %p145 = scmp.eq.s32.totalorder %s21, 0
      %p146 = por %p144, %p145
      %p147 = scmp.ne.s32.totalorder %s139, %s141
      %p148 = scmp.eq.s32.totalorder %s26, 1
      %p149 = por %p147, %p148
      %p150 = scmp.ne.s32.totalorder %s141, %s142
      %p151 = scmp.eq.s32.totalorder %s26, 0
      %p152 = por %p150, %p151
      %p153 = scmp.ne.s32.totalorder %s141, %s142
      %p154 = scmp.eq.s32.totalorder %s27, 1
      %p155 = por %p153, %p154
      %p157 = scmp.ne.s32.totalorder %s142, %s156
      %p158 = scmp.eq.s32.totalorder %s27, 0
      %p159 = por %p157, %p158
      %s161 = sadd.s32 %s160, 1
      %p164 = scmp.eq.s32.totalorder %s21, 1
      %p165 = scmp.ne.s32.totalorder %s160, %s162
      %p166 = scmp.eq.s32.totalorder %s21, 0
      %p167 = por %p165, %p166
      %p168 = scmp.ne.s32.totalorder %s160, %s162
      %p169 = scmp.eq.s32.totalorder %s26, 1
      %p170 = por %p168, %p169
      %p171 = scmp.ne.s32.totalorder %s162, %s163
      %p172 = scmp.eq.s32.totalorder %s26, 0
      %p173 = por %p171, %p172
      %p174 = scmp.ne.s32.totalorder %s162, %s163
      %p175 = scmp.eq.s32.totalorder %s27, 1
      %p176 = por %p174, %p175
      %p178 = scmp.ne.s32.totalorder %s163, %s177
      %p179 = scmp.eq.s32.totalorder %s27, 0
      %p180 = por %p178, %p179
      %s182 = sadd.s32 %s181, 1
      %p185 = scmp.eq.s32.totalorder %s21, 1
      %p186 = scmp.ne.s32.totalorder %s181, %s183
      %p187 = scmp.eq.s32.totalorder %s21, 0
      %p188 = por %p186, %p187
      %p189 = scmp.ne.s32.totalorder %s181, %s183
      %p190 = scmp.eq.s32.totalorder %s26, 1
      %p191 = por %p189, %p190
      %p192 = scmp.ne.s32.totalorder %s183, %s184
      %p193 = scmp.eq.s32.totalorder %s26, 0
      %p194 = por %p192, %p193
      %p195 = scmp.ne.s32.totalorder %s183, %s184
      %p196 = scmp.eq.s32.totalorder %s27, 1
      %p197 = por %p195, %p196
      %p199 = scmp.ne.s32.totalorder %s184, %s198
      %p200 = scmp.eq.s32.totalorder %s27, 0
      %p201 = por %p199, %p200
      %s203 = sadd.s32 %s202, 1
      %p206 = scmp.eq.s32.totalorder %s21, 1
      %p207 = scmp.ne.s32.totalorder %s202, %s204
      %p208 = scmp.eq.s32.totalorder %s21, 0
      %p209 = por %p207, %p208
      %p210 = scmp.ne.s32.totalorder %s202, %s204
      %p211 = scmp.eq.s32.totalorder %s26, 1
      %p212 = por %p210, %p211
      %p213 = scmp.ne.s32.totalorder %s204, %s205
      %p214 = scmp.eq.s32.totalorder %s26, 0
      %p215 = por %p213, %p214
      %p216 = scmp.ne.s32.totalorder %s204, %s205
      %p217 = scmp.eq.s32.totalorder %s27, 1
      %p218 = por %p216, %p217
      %p220 = scmp.ne.s32.totalorder %s205, %s219
      %p221 = scmp.eq.s32.totalorder %s27, 0
      %p222 = por %p220, %p221
      %s224 = sadd.s32 %s223, 1
      %p227 = scmp.eq.s32.totalorder %s21, 1
      %p228 = scmp.ne.s32.totalorder %s223, %s225
      %p229 = scmp.eq.s32.totalorder %s21, 0
      %p230 = por %p228, %p229
      %p231 = scmp.ne.s32.totalorder %s223, %s225
      %p232 = scmp.eq.s32.totalorder %s26, 1
      %p233 = por %p231, %p232
      %p234 = scmp.ne.s32.totalorder %s225, %s226
      %p235 = scmp.eq.s32.totalorder %s26, 0
      %p236 = por %p234, %p235
      %p237 = scmp.ne.s32.totalorder %s225, %s226
      %p238 = scmp.eq.s32.totalorder %s27, 1
      %p239 = por %p237, %p238
      %p241 = scmp.ne.s32.totalorder %s226, %s240
      %p242 = scmp.eq.s32.totalorder %s27, 0
      %p243 = por %p241, %p242
      %s245 = sadd.s32 %s244, 1
      %p248 = scmp.eq.s32.totalorder %s21, 1
      %p249 = scmp.ne.s32.totalorder %s244, %s246
      %p250 = scmp.eq.s32.totalorder %s21, 0
      %p251 = por %p249, %p250
      %p252 = scmp.ne.s32.totalorder %s244, %s246
      %p253 = scmp.eq.s32.totalorder %s26, 1
      %p254 = por %p252, %p253
      %p255 = scmp.ne.s32.totalorder %s246, %s247
      %p256 = scmp.eq.s32.totalorder %s26, 0
      %p257 = por %p255, %p256
      %p258 = scmp.ne.s32.totalorder %s246, %s247
      %p259 = scmp.eq.s32.totalorder %s27, 1
      %p260 = por %p258, %p259
      %p262 = scmp.ne.s32.totalorder %s247, %s261
      %p263 = scmp.eq.s32.totalorder %s27, 0
      %p264 = por %p262, %p263
      %s266 = sadd.s32 %s265, 1
      %p269 = scmp.eq.s32.totalorder %s21, 1
      %p270 = scmp.ne.s32.totalorder %s265, %s267
      %p271 = scmp.eq.s32.totalorder %s21, 0
      %p272 = por %p270, %p271
      %p273 = scmp.ne.s32.totalorder %s265, %s267
      %p274 = scmp.eq.s32.totalorder %s26, 1
      %p275 = por %p273, %p274
      %p276 = scmp.ne.s32.totalorder %s267, %s268
      %p277 = scmp.eq.s32.totalorder %s26, 0
      %p278 = por %p276, %p277
      %p279 = scmp.ne.s32.totalorder %s267, %s268
      %p280 = scmp.eq.s32.totalorder %s27, 1
      %p281 = por %p279, %p280
      %p283 = scmp.ne.s32.totalorder %s268, %s282
      %p284 = scmp.eq.s32.totalorder %s27, 0
      %p285 = por %p283, %p284
      %s286 = ssub.s32 %s21, %s28
      %p287 = scmp.eq.s32.totalorder %s286, 0
      %s289 = sadd.s32 %s288, 1
      %s290 = scalar_select %p287, %s288, %s289
      %p293 = pneg %p287
      %p294 = scmp.eq.s32.totalorder %s21, 1
      %p295 = por %p293, %p294
      %p296 = scmp.ne.s32.totalorder %s288, %s291
      %p297 = scmp.eq.s32.totalorder %s21, 0
      %p298 = por %p296, %p297
      %p299 = scmp.ne.s32.totalorder %s288, %s291
      %p300 = scmp.eq.s32.totalorder %s26, 1
      %p301 = por %p299, %p300
      %p302 = scmp.ne.s32.totalorder %s291, %s292
      %p303 = scmp.eq.s32.totalorder %s26, 0
      %p304 = por %p302, %p303
      %p305 = scmp.ne.s32.totalorder %s291, %s292
      %p306 = scmp.eq.s32.totalorder %s27, 1
      %p307 = por %p305, %p306
      %p309 = scmp.ne.s32.totalorder %s292, %s308
      %p310 = scmp.eq.s32.totalorder %s27, 0
      %p311 = por %p309, %p310
      %p312 = scmp.le.s32.totalorder 1, %s21
      %p313 = scmp.lt.s32.totalorder %s21, 3
      %p314 = pnand %p312, %p313
      %p315 = pneg %p314
      // Predicated region
      $region9: #{tpu_custom_call.1} parent=5 // pred_check
        _
      $region10: #{tpu_custom_call.1} parent=5 // pred_check_branch
        %317 = sbr.rel (%p314) target = $region12
      $region11: #{tpu_custom_call.1} parent=5 // pred_region
        %s318 = ssub.s32 %s21, 1
        // Predicated region
        $region13: #{tpu_custom_call.1} parent=11 // pred_check
          %p319 = pneg %p68
        $region14: #{tpu_custom_call.1} parent=11 // pred_check_branch
          %321 = sbr.rel (%p319) target = $region16
        $region15: #{tpu_custom_call.1} parent=11 // pred_region
          _
        $region16: #{tpu_custom_call.1} parent=11 // pred_fallthru
          _
        // Predicated region
        $region17: #{tpu_custom_call.1} parent=11 // pred_check
          %p322 = pneg %p89
        $region18: #{tpu_custom_call.1} parent=11 // pred_check_branch
          %324 = sbr.rel (%p322) target = $region20
        $region19: #{tpu_custom_call.1} parent=11 // pred_region
          _
        $region20: #{tpu_custom_call.1} parent=11 // pred_fallthru
          _
        // Predicated region
        $region21: #{tpu_custom_call.1} parent=11 // pred_check
          %p325 = pneg %p110
        $region22: #{tpu_custom_call.1} parent=11 // pred_check_branch
          %327 = sbr.rel (%p325) target = $region24
        $region23: #{tpu_custom_call.1} parent=11 // pred_region
          _
        $region24: #{tpu_custom_call.1} parent=11 // pred_fallthru
          _
        // Predicated region
        $region25: #{tpu_custom_call.1} parent=11 // pred_check
          %p328 = pneg %p131
        $region26: #{tpu_custom_call.1} parent=11 // pred_check_branch
          %330 = sbr.rel (%p328) target = $region28
        $region27: #{tpu_custom_call.1} parent=11 // pred_region
          _
        $region28: #{tpu_custom_call.1} parent=11 // pred_fallthru
          _
        // Predicated region
        $region29: #{tpu_custom_call.1} parent=11 // pred_check
          %p331 = pneg %p152
        $region30: #{tpu_custom_call.1} parent=11 // pred_check_branch
          %333 = sbr.rel (%p331) target = $region32
        $region31: #{tpu_custom_call.1} parent=11 // pred_region
          _
        $region32: #{tpu_custom_call.1} parent=11 // pred_fallthru
          _
        // Predicated region
        $region33: #{tpu_custom_call.1} parent=11 // pred_check
          %p334 = pneg %p173
        $region34: #{tpu_custom_call.1} parent=11 // pred_check_branch
          %336 = sbr.rel (%p334) target = $region36
        $region35: #{tpu_custom_call.1} parent=11 // pred_region
          _
        $region36: #{tpu_custom_call.1} parent=11 // pred_fallthru
          _
        // Predicated region
        $region37: #{tpu_custom_call.1} parent=11 // pred_check
          %p337 = pneg %p194
        $region38: #{tpu_custom_call.1} parent=11 // pred_check_branch
          %339 = sbr.rel (%p337) target = $region40
        $region39: #{tpu_custom_call.1} parent=11 // pred_region
          _
        $region40: #{tpu_custom_call.1} parent=11 // pred_fallthru
          _
        // Predicated region
        $region41: #{tpu_custom_call.1} parent=11 // pred_check
          %p340 = pneg %p215
        $region42: #{tpu_custom_call.1} parent=11 // pred_check_branch
          %342 = sbr.rel (%p340) target = $region44
        $region43: #{tpu_custom_call.1} parent=11 // pred_region
          _
        $region44: #{tpu_custom_call.1} parent=11 // pred_fallthru
          _
        // Predicated region
        $region45: #{tpu_custom_call.1} parent=11 // pred_check
          %p343 = pneg %p236
        $region46: #{tpu_custom_call.1} parent=11 // pred_check_branch
          %345 = sbr.rel (%p343) target = $region48
        $region47: #{tpu_custom_call.1} parent=11 // pred_region
          _
        $region48: #{tpu_custom_call.1} parent=11 // pred_fallthru
          _
        // Predicated region
        $region49: #{tpu_custom_call.1} parent=11 // pred_check
          %p346 = pneg %p257
        $region50: #{tpu_custom_call.1} parent=11 // pred_check_branch
          %348 = sbr.rel (%p346) target = $region52
        $region51: #{tpu_custom_call.1} parent=11 // pred_region
          _
        $region52: #{tpu_custom_call.1} parent=11 // pred_fallthru
          _
        // Predicated region
        $region53: #{tpu_custom_call.1} parent=11 // pred_check
          %p349 = pneg %p278
        $region54: #{tpu_custom_call.1} parent=11 // pred_check_branch
          %351 = sbr.rel (%p349) target = $region56
        $region55: #{tpu_custom_call.1} parent=11 // pred_region
          _
        $region56: #{tpu_custom_call.1} parent=11 // pred_fallthru
          _
      $region12: #{tpu_custom_call.1} parent=5 // pred_fallthru
        _
      %p352 = scmp.lt.s32.totalorder %s21, 2
      // Predicated region
      $region57: #{tpu_custom_call.1} parent=5 // pred_check
        %p353 = pneg %p352
      $region58: #{tpu_custom_call.1} parent=5 // pred_check_branch
        %355 = sbr.rel (%p353) target = $region60
      $region59: #{tpu_custom_call.1} parent=5 // pred_region
        // Predicated region
        $region61: #{tpu_custom_call.1} parent=59 // pred_check
          %p356 = pneg %p41
        $region62: #{tpu_custom_call.1} parent=59 // pred_check_branch
          %358 = sbr.rel (%p356) target = $region64
        $region63: #{tpu_custom_call.1} parent=59 // pred_region
          %p359 = scmp.lt.s32.totalorder %s21, 1
          %s360 = scalar_select %p359, %s21, 1
          %s361 = smul.addr %s360, 8
          %s362 = smul.addr %s361, 4
          %s363 = scalar_lea.vmem %s0, %s362
        $region64: #{tpu_custom_call.1} parent=59 // pred_fallthru
          _
      $region60: #{tpu_custom_call.1} parent=5 // pred_fallthru
        _
      %p364 = scmp.le.s32.totalorder 1, %s21
      %p365 = scmp.lt.s32.totalorder %s21, 3
      %p366 = pnand %p364, %p365
      %p367 = pneg %p366
      // Predicated region
      $region65: #{tpu_custom_call.1} parent=5 // pred_check
        _
      $region66: #{tpu_custom_call.1} parent=5 // pred_check_branch
        %369 = sbr.rel (%p366) target = $region68
      $region67: #{tpu_custom_call.1} parent=5 // pred_region
        %s370 = ssub.s32 %s21, 1
        %p371 = scmp.lt.s32.totalorder %s26, 1
        %s372 = scalar_select %p371, %s26, 1
        %s373 = smul.addr %s372, 8
        %s374 = smul.addr %s373, 4
        %s375 = scalar_lea.vmem %s0, %s374
        %p376 = pneg %p47
        %p377 = pneg %p44
        %p378 = pneg %p68
        %p379 = pneg %p65
        %p380 = pneg %p89
        %p381 = pneg %p86
        %p382 = pneg %p110
        %p383 = pneg %p107
        %p384 = pneg %p131
        %p385 = pneg %p128
        %p386 = pneg %p152
        %p387 = pneg %p149
        %p388 = pneg %p173
        %p389 = pneg %p170
        %p390 = pneg %p194
        %p391 = pneg %p191
        %p392 = pneg %p215
        %p393 = pneg %p212
        %p394 = pneg %p236
        %p395 = pneg %p233
        %p396 = pneg %p257
        %p397 = pneg %p254
        %p398 = pneg %p278
        %p399 = pneg %p275
        %p400 = pneg %p304
        %p401 = pneg %p301
        %s402 = sand.u32 %s291, 1
        %s403 = scalar_lea.sflag [#allocation3], %s402
        %s404 = sand.u32 %s291, 1
        %s405 = scalar_lea.vmem [#allocation2], %s404
        %p406 = scmp.lt.s32.totalorder %s26, 1
        %s407 = scalar_select %p406, %s26, 1
        %s408 = smul.addr %s407, 8
        %s409 = smul.addr %s408, 4
        %s410 = scalar_lea.vmem %s0, %s409
        %v412 = vld [vmem:[%s410] sm:$0xf]
        %v413 = vld [vmem:[%s410 + $0x4] sm:$0xf]
        %v414 = vld [vmem:[%s410 + $0x8] sm:$0xf]
        %v415 = vld [vmem:[%s410 + $0xc] sm:$0xf]
        %v416 = vld [vmem:[%s410 + $0x10] sm:$0xf]
        %v417 = vld [vmem:[%s410 + $0x14] sm:$0xf]
        %v418 = vld [vmem:[%s410 + $0x18] sm:$0xf]
        %v419 = vld [vmem:[%s410 + $0x1c] sm:$0xf]
        %v420 = vunpack.c.l.bf16 %v412
        %v421 = vunpack.c.l.bf16 %v413
        %v422 = vunpack.c.l.bf16 %v414
        %v423 = vunpack.c.l.bf16 %v415
        %v424 = vunpack.c.l.bf16 %v416
        %v425 = vunpack.c.l.bf16 %v417
        %v426 = vunpack.c.l.bf16 %v418
        %v427 = vunpack.c.l.bf16 %v419
        %v428 = vld [vmem:[%s1] sm:$0xf]
        %v429 = vld [vmem:[%s1 + $0x4] sm:$0xf]
        %v430 = vld [vmem:[%s2] sm:$0x1]
        %v432 = vperm.slane %v430, 0
        %v442 = vunpack.c.l.b16 %v412
        %v443 = vunpack.c.l.b16 %v413
        %v444 = vunpack.c.l.b16 %v414
        %v445 = vunpack.c.l.b16 %v415
        %v446 = vunpack.c.l.b16 %v416
        %v447 = vunpack.c.l.b16 %v417
        %v448 = vunpack.c.l.b16 %v418
        %v449 = vunpack.c.l.b16 %v419
        %v450 = vpack.c.b16 %v443, %v442
        %v451 = vpack.c.b16 %v445, %v444
        %v452 = vpack.c.b16 %v447, %v446
        %v453 = vpack.c.b16 %v449, %v448
        %v456 = vunpack.c.l.b16 %v428
        %v457 = vunpack.c.l.b16 %v429
        %v458 = vpack.c.b16 %v457, %v456
        %vm460 = vcmask 130048
        %v462 = vsel %vm460, %v450, 0
        %v465 = vsel %vm460, %v451, 0
        %v468 = vsel %vm460, %v452, 0
        %v471 = vsel %vm460, %v453, 0
        %473 = vmatpush.bf16.msra.mxu0 0
        %474 = vmatpush.bf16.msra.mxu0 0
        %475 = vmatpush.bf16.msra.mxu0 0
        %476 = vmatpush.bf16.msra.mxu0 0
        %477 = vmatpush.bf16.msra.mxu0 0
        %478 = vmatpush.bf16.msra.mxu0 0
        %479 = vmatpush.bf16.msra.mxu0 0
        %480 = vmatpush.bf16.msra.mxu0 %v458
        %481 = vmatmul.bf16.gmra.mxu0 %v462
        %v482 = vpop.f32.mrf.mxu0
        %v483 = vadd.f32 %v432, %v482
        %v484 = vpop.f32.mrf.mxu0
        %v485 = vadd.f32 %v432, %v484
        %486 = vmatmul.bf16.gmra.mxu0 %v465
        %v487 = vpop.f32.mrf.mxu0
        %v488 = vadd.f32 %v432, %v487
        %v489 = vpop.f32.mrf.mxu0
        %v490 = vadd.f32 %v432, %v489
        %491 = vmatmul.bf16.gmra.mxu0 %v468
        %v492 = vpop.f32.mrf.mxu0
        %v493 = vadd.f32 %v432, %v492
        %v494 = vpop.f32.mrf.mxu0
        %v495 = vadd.f32 %v432, %v494
        %496 = vmatmul.bf16.gmra.mxu0 %v471
        %v497 = vpop.f32.mrf.mxu0
        %v498 = vadd.f32 %v432, %v497
        %v499 = vpop.f32.mrf.mxu0
        %v500 = vadd.f32 %v432, %v499
        %501 = vdwg.mxu0
        %v502 = vmax.f32 %v483, 0.0
        %v503 = vmax.f32 %v485, 0.0
        %v504 = vmax.f32 %v488, 0.0
        %v505 = vmax.f32 %v490, 0.0
        %v506 = vmax.f32 %v493, 0.0
        %v507 = vmax.f32 %v495, 0.0
        %v508 = vmax.f32 %v498, 0.0
        %v509 = vmax.f32 %v500, 0.0
        %v510 = vpack.c.bf16 %v503, %v502
        %v511 = vpack.c.bf16 %v505, %v504
        %v512 = vpack.c.bf16 %v507, %v506
        %v513 = vpack.c.bf16 %v509, %v508
        %v514 = vld [vmem:[%s3] sm:$0x1]
        %vm515 = vcmask 15360
        %v517 = vsel %vm515, %v510, 0
        %v520 = vsel %vm515, %v511, 0
        %v523 = vsel %vm515, %v512, 0
        %v526 = vsel %vm515, %v513, 0
        %vm528 = vcmask 1040384
        %v530 = vsel %vm528, %v514, 0
        %532 = vmatpush.bf16.msra.mxu0 0
        %533 = vmatpush.bf16.msra.mxu0 0
        %534 = vmatpush.bf16.msra.mxu0 0
        %535 = vmatpush.bf16.msra.mxu0 0
        %536 = vmatpush.bf16.msra.mxu0 0
        %537 = vmatpush.bf16.msra.mxu0 0
        %538 = vmatpush.bf16.msra.mxu0 0
        %539 = vmatpush.bf16.msra.mxu0 %v530
        %540 = vmatmul.bf16.gmra.mxu0 %v517
        %v541 = vpop.f32.mrf.mxu0
        %v542 = vadd.f32 0.0, %v541
        %v543 = vpop.f32.mrf.mxu0
        %v544 = vadd.f32 0.0, %v543
        %545 = vmatmul.bf16.gmra.mxu0 %v520
        %v546 = vpop.f32.mrf.mxu0
        %v547 = vadd.f32 0.0, %v546
        %v548 = vpop.f32.mrf.mxu0
        %v549 = vadd.f32 0.0, %v548
        %550 = vmatmul.bf16.gmra.mxu0 %v523
        %v551 = vpop.f32.mrf.mxu0
        %v552 = vadd.f32 0.0, %v551
        %v553 = vpop.f32.mrf.mxu0
        %v554 = vadd.f32 0.0, %v553
        %555 = vmatmul.bf16.gmra.mxu0 %v526
        %v556 = vpop.f32.mrf.mxu0
        %v557 = vadd.f32 0.0, %v556
        %v558 = vpop.f32.mrf.mxu0
        %v559 = vadd.f32 0.0, %v558
        %560 = vdwg.mxu0
        %v561 = vsub.f32 0.0, %v542
        %v562 = vsub.f32 0.0, %v544
        %v563 = vsub.f32 0.0, %v547
        %v564 = vsub.f32 0.0, %v549
        %v565 = vsub.f32 0.0, %v552
        %v566 = vsub.f32 0.0, %v554
        %v567 = vsub.f32 0.0, %v557
        %v568 = vsub.f32 0.0, %v559
        %v569 = vmul.f32 %v561, 1.442695
        %v570 = vpow.pop %v569
        %v571 = vmul.f32 %v562, 1.442695
        %v572 = vpow.pop %v571
        %v573 = vmul.f32 %v563, 1.442695
        %v574 = vpow.pop %v573
        %v575 = vmul.f32 %v564, 1.442695
        %v576 = vpow.pop %v575
        %v577 = vmul.f32 %v565, 1.442695
        %v578 = vpow.pop %v577
        %v579 = vmul.f32 %v566, 1.442695
        %v580 = vpow.pop %v579
        %v581 = vmul.f32 %v567, 1.442695
        %v582 = vpow.pop %v581
        %v583 = vmul.f32 %v568, 1.442695
        %v584 = vpow.pop %v583
        %v585 = vadd.f32 %v570, 1.0
        %v586 = vadd.f32 %v572, 1.0
        %v587 = vadd.f32 %v574, 1.0
        %v588 = vadd.f32 %v576, 1.0
        %v589 = vadd.f32 %v578, 1.0
        %v590 = vadd.f32 %v580, 1.0
        %v591 = vadd.f32 %v582, 1.0
        %v592 = vadd.f32 %v584, 1.0
        %v593 = vrcp.pop %v585
        %v594 = vrcp.pop %v586
        %v595 = vrcp.pop %v587
        %v596 = vrcp.pop %v588
        %v597 = vrcp.pop %v589
        %v598 = vrcp.pop %v590
        %v599 = vrcp.pop %v591
        %v600 = vrcp.pop %v592
        %602 = vset.pattern.permute.xlu0 0
        %603 = vperm.xlu0 %602, %v593
        %v604 = vpop.permute.xlu0 %603
        %607 = vset.pattern.permute.xlu0 0
        %608 = vperm.xlu0 %607, %v594
        %v609 = vpop.permute.xlu0 %608
        %612 = vset.pattern.permute.xlu0 0
        %613 = vperm.xlu0 %612, %v595
        %v614 = vpop.permute.xlu0 %613
        %617 = vset.pattern.permute.xlu0 0
        %618 = vperm.xlu0 %617, %v596
        %v619 = vpop.permute.xlu0 %618
        %622 = vset.pattern.permute.xlu0 0
        %623 = vperm.xlu0 %622, %v597
        %v624 = vpop.permute.xlu0 %623
        %627 = vset.pattern.permute.xlu0 0
        %628 = vperm.xlu0 %627, %v598
        %v629 = vpop.permute.xlu0 %628
        %632 = vset.pattern.permute.xlu0 0
        %633 = vperm.xlu0 %632, %v599
        %v634 = vpop.permute.xlu0 %633
        %637 = vset.pattern.permute.xlu0 0
        %638 = vperm.xlu0 %637, %v600
        %v639 = vpop.permute.xlu0 %638
        %v641 = vmul.f32 %v420, %v604
        %v642 = vmul.f32 %v421, %v609
        %v643 = vmul.f32 %v422, %v614
        %v644 = vmul.f32 %v423, %v619
        %v645 = vmul.f32 %v424, %v624
        %v646 = vmul.f32 %v425, %v629
        %v647 = vmul.f32 %v426, %v634
        %v648 = vmul.f32 %v427, %v639
        %v649 = vpack.c.bf16 %v642, %v641
        %v650 = vpack.c.bf16 %v644, %v643
        %v651 = vpack.c.bf16 %v646, %v645
        %v652 = vpack.c.bf16 %v648, %v647
        %v653 = vld [vmem:[%s4] sm:$0xf]
        %v654 = vld [vmem:[%s4 + $0x4] sm:$0xf]
        %v655 = vld [vmem:[%s5] sm:$0x1]
        %v657 = vperm.slane %v655, 0
        %v661 = vunpack.c.l.b16 %v653
        %v662 = vunpack.c.l.b16 %v654
        %v663 = vpack.c.b16 %v662, %v661
        %v666 = vsel %vm460, %v649, 0
        %v669 = vsel %vm460, %v650, 0
        %v672 = vsel %vm460, %v651, 0
        %v675 = vsel %vm460, %v652, 0
        %677 = vmatpush.bf16.msra.mxu0 0
        %678 = vmatpush.bf16.msra.mxu0 0
        %679 = vmatpush.bf16.msra.mxu0 0
        %680 = vmatpush.bf16.msra.mxu0 0
        %681 = vmatpush.bf16.msra.mxu0 0
        %682 = vmatpush.bf16.msra.mxu0 0
        %683 = vmatpush.bf16.msra.mxu0 0
        %684 = vmatpush.bf16.msra.mxu0 %v663
        %685 = vmatmul.bf16.gmra.mxu0 %v666
        %v686 = vpop.f32.mrf.mxu0
        %v687 = vadd.f32 %v657, %v686
        %v688 = vpop.f32.mrf.mxu0
        %v689 = vadd.f32 %v657, %v688
        %690 = vmatmul.bf16.gmra.mxu0 %v669
        %v691 = vpop.f32.mrf.mxu0
        %v692 = vadd.f32 %v657, %v691
        %v693 = vpop.f32.mrf.mxu0
        %v694 = vadd.f32 %v657, %v693
        %695 = vmatmul.bf16.gmra.mxu0 %v672
        %v696 = vpop.f32.mrf.mxu0
        %v697 = vadd.f32 %v657, %v696
        %v698 = vpop.f32.mrf.mxu0
        %v699 = vadd.f32 %v657, %v698
        %700 = vmatmul.bf16.gmra.mxu0 %v675
        %v701 = vpop.f32.mrf.mxu0
        %v702 = vadd.f32 %v657, %v701
        %v703 = vpop.f32.mrf.mxu0
        %v704 = vadd.f32 %v657, %v703
        %705 = vdwg.mxu0
        %v706 = vmax.f32 %v687, 0.0
        %v707 = vmax.f32 %v689, 0.0
        %v708 = vmax.f32 %v692, 0.0
        %v709 = vmax.f32 %v694, 0.0
        %v710 = vmax.f32 %v697, 0.0
        %v711 = vmax.f32 %v699, 0.0
        %v712 = vmax.f32 %v702, 0.0
        %v713 = vmax.f32 %v704, 0.0
        %v722 = vrot.slane %v706, 7
        %v723 = vrot.slane %v707, 7
        %v724 = vsel %vm528, %v722, %v723
        %v725 = vrot.slane %v708, 7
        %v726 = vsel %vm528, %v723, %v725
        %v727 = vrot.slane %v709, 7
        %v728 = vsel %vm528, %v725, %v727
        %v729 = vrot.slane %v710, 7
        %v730 = vsel %vm528, %v727, %v729
        %v731 = vrot.slane %v711, 7
        %v732 = vsel %vm528, %v729, %v731
        %v733 = vrot.slane %v712, 7
        %v734 = vsel %vm528, %v731, %v733
        %v735 = vrot.slane %v713, 7
        %v736 = vsel %vm528, %v733, %v735
        %v746 = vsel %vm528, 0.0, %v722
        %v747 = vsel %vm528, %v735, 0.0
        %v748 = vlaneseq
        %v749 = vshrl.u32 %v748, 7
        %v750 = vadd.s32 %v749, 8
        %v751 = vadd.s32 %v749, 16
        %v752 = vadd.s32 %v749, 24
        %v753 = vadd.s32 %v749, 32
        %v754 = vadd.s32 %v749, 40
        %v755 = vadd.s32 %v749, 48
        %v756 = vadd.s32 %v749, 56
        %vm757 = vcmp.lt.s32.totalorder %v749, 0
        %v758 = vsub.s32 0, %v749
        %v759 = vsel %vm757, %v758, %v749
        %v760 = vshrl.u32 %v759, 3
        %v761 = vand.u32 %v759, 7
        %v762 = vsub.s32 0, %v761
        %v763 = vsel %vm757, %v762, %v761
        %vm764 = vcmp.lt.s32.totalorder %v750, 0
        %v765 = vsub.s32 0, %v750
        %v766 = vsel %vm764, %v765, %v750
        %v767 = vshrl.u32 %v766, 3
        %v768 = vand.u32 %v766, 7
        %v769 = vsub.s32 0, %v768
        %v770 = vsel %vm764, %v769, %v768
        %vm771 = vcmp.lt.s32.totalorder %v751, 0
        %v772 = vsub.s32 0, %v751
        %v773 = vsel %vm771, %v772, %v751
        %v774 = vshrl.u32 %v773, 3
        %v775 = vand.u32 %v773, 7
        %v776 = vsub.s32 0, %v775
        %v777 = vsel %vm771, %v776, %v775
        %vm778 = vcmp.lt.s32.totalorder %v752, 0
        %v779 = vsub.s32 0, %v752
        %v780 = vsel %vm778, %v779, %v752
        %v781 = vshrl.u32 %v780, 3
        %v782 = vand.u32 %v780, 7
        %v783 = vsub.s32 0, %v782
        %v784 = vsel %vm778, %v783, %v782
        %vm785 = vcmp.lt.s32.totalorder %v753, 0
        %v786 = vsub.s32 0, %v753
        %v787 = vsel %vm785, %v786, %v753
        %v788 = vshrl.u32 %v787, 3
        %v789 = vand.u32 %v787, 7
        %v790 = vsub.s32 0, %v789
        %v791 = vsel %vm785, %v790, %v789
        %vm792 = vcmp.lt.s32.totalorder %v754, 0
        %v793 = vsub.s32 0, %v754
        %v794 = vsel %vm792, %v793, %v754
        %v795 = vshrl.u32 %v794, 3
        %v796 = vand.u32 %v794, 7
        %v797 = vsub.s32 0, %v796
        %v798 = vsel %vm792, %v797, %v796
        %vm799 = vcmp.lt.s32.totalorder %v755, 0
        %v800 = vsub.s32 0, %v755
        %v801 = vsel %vm799, %v800, %v755
        %v802 = vshrl.u32 %v801, 3
        %v803 = vand.u32 %v801, 7
        %v804 = vsub.s32 0, %v803
        %v805 = vsel %vm799, %v804, %v803
        %vm806 = vcmp.lt.s32.totalorder %v756, 0
        %v807 = vsub.s32 0, %v756
        %v808 = vsel %vm806, %v807, %v756
        %v809 = vshrl.u32 %v808, 3
        %v810 = vand.u32 %v808, 7
        %v811 = vsub.s32 0, %v810
        %v812 = vsel %vm806, %v811, %v810
        %vm813 = vcmp.ne.s32.totalorder %v763, 0
        %vm814 = vcmp.ne.s32.totalorder %v770, 0
        %vm815 = vcmp.ne.s32.totalorder %v777, 0
        %vm816 = vcmp.ne.s32.totalorder %v784, 0
        %vm817 = vcmp.ne.s32.totalorder %v791, 0
        %vm818 = vcmp.ne.s32.totalorder %v798, 0
        %vm819 = vcmp.ne.s32.totalorder %v805, 0
        %vm820 = vcmp.ne.s32.totalorder %v812, 0
        %vm821 = vcmp.lt.s32.totalorder %v763, 0
        %vm822 = vcmp.lt.s32.totalorder %v770, 0
        %vm823 = vcmp.lt.s32.totalorder %v777, 0
        %vm824 = vcmp.lt.s32.totalorder %v784, 0
        %vm825 = vcmp.lt.s32.totalorder %v791, 0
        %vm826 = vcmp.lt.s32.totalorder %v798, 0
        %vm827 = vcmp.lt.s32.totalorder %v805, 0
        %vm828 = vcmp.lt.s32.totalorder %v812, 0
        %vm829 = vmand %vm821, %vm813
        %vm830 = vmand %vm822, %vm814
        %vm831 = vmand %vm823, %vm815
        %vm832 = vmand %vm824, %vm816
        %vm833 = vmand %vm825, %vm817
        %vm834 = vmand %vm826, %vm818
        %vm835 = vmand %vm827, %vm819
        %vm836 = vmand %vm828, %vm820
        %v837 = vadd.s32 %v763, 8
        %v838 = vadd.s32 %v770, 8
        %v839 = vadd.s32 %v777, 8
        %v840 = vadd.s32 %v784, 8
        %v841 = vadd.s32 %v791, 8
        %v842 = vadd.s32 %v798, 8
        %v843 = vadd.s32 %v805, 8
        %v844 = vadd.s32 %v812, 8
        %v845 = vsel %vm829, %v837, %v763
        %v846 = vsel %vm830, %v838, %v770
        %v847 = vsel %vm831, %v839, %v777
        %v848 = vsel %vm832, %v840, %v784
        %v849 = vsel %vm833, %v841, %v791
        %v850 = vsel %vm834, %v842, %v798
        %v851 = vsel %vm835, %v843, %v805
        %v852 = vsel %vm836, %v844, %v812
        %vm853 = vcmp.ge.s32.totalorder %v845, 1
        %vm854 = vcmp.ge.s32.totalorder %v846, 1
        %vm855 = vcmp.ge.s32.totalorder %v847, 1
        %vm856 = vcmp.ge.s32.totalorder %v848, 1
        %vm857 = vcmp.ge.s32.totalorder %v849, 1
        %vm858 = vcmp.ge.s32.totalorder %v850, 1
        %vm859 = vcmp.ge.s32.totalorder %v851, 1
        %vm860 = vcmp.ge.s32.totalorder %v852, 1
        %vm861 = vcmp.lt.s32.totalorder %v845, 7
        %vm862 = vcmp.lt.s32.totalorder %v846, 7
        %vm863 = vcmp.lt.s32.totalorder %v847, 7
        %vm864 = vcmp.lt.s32.totalorder %v848, 7
        %vm865 = vcmp.lt.s32.totalorder %v849, 7
        %vm866 = vcmp.lt.s32.totalorder %v850, 7
        %vm867 = vcmp.lt.s32.totalorder %v851, 7
        %vm868 = vcmp.lt.s32.totalorder %v852, 7
        %v869 = vsel %vm853, 1, 0
        %v870 = vsel %vm854, 1, 0
        %v871 = vsel %vm855, 1, 0
        %v872 = vsel %vm856, 1, 0
        %v873 = vsel %vm857, 1, 0
        %v874 = vsel %vm858, 1, 0
        %v875 = vsel %vm859, 1, 0
        %v876 = vsel %vm860, 1, 0
        %vm877 = vcmp.eq.s32.totalorder %v869, 1
        %vm878 = vcmp.eq.s32.totalorder %v870, 1
        %vm879 = vcmp.eq.s32.totalorder %v871, 1
        %vm880 = vcmp.eq.s32.totalorder %v872, 1
        %vm881 = vcmp.eq.s32.totalorder %v873, 1
        %vm882 = vcmp.eq.s32.totalorder %v874, 1
        %vm883 = vcmp.eq.s32.totalorder %v875, 1
        %vm884 = vcmp.eq.s32.totalorder %v876, 1
        %v885 = vsel %vm878, %v746, 0.0
        %v886 = vsel %vm879, %v724, 0.0
        %v887 = vsel %vm880, %v726, 0.0
        %v888 = vsel %vm881, %v728, 0.0
        %v889 = vsel %vm882, %v730, 0.0
        %v890 = vsel %vm883, %v732, 0.0
        %v891 = vsel %vm884, %v734, 0.0
        %v892 = vsel %vm861, 1, 0
        %v893 = vsel %vm862, 1, 0
        %v894 = vsel %vm863, 1, 0
        %v895 = vsel %vm864, 1, 0
        %v896 = vsel %vm865, 1, 0
        %v897 = vsel %vm866, 1, 0
        %v898 = vsel %vm867, 1, 0
        %v899 = vsel %vm868, 1, 0
        %vm900 = vcmp.eq.s32.totalorder %v892, 1
        %vm901 = vcmp.eq.s32.totalorder %v893, 1
        %vm902 = vcmp.eq.s32.totalorder %v894, 1
        %vm903 = vcmp.eq.s32.totalorder %v895, 1
        %vm904 = vcmp.eq.s32.totalorder %v896, 1
        %vm905 = vcmp.eq.s32.totalorder %v897, 1
        %vm906 = vcmp.eq.s32.totalorder %v898, 1
        %vm907 = vcmp.eq.s32.totalorder %v899, 1
        %vm910 = vcmask 1045504
        %v911 = vrot.slane 0.0, 2
        %v912 = vrot.slane %v746, 2
        %v913 = vsel %vm910, %v911, %v912
        %v914 = vrot.slane %v724, 2
        %v915 = vsel %vm910, %v912, %v914
        %v916 = vrot.slane %v726, 2
        %v917 = vsel %vm910, %v914, %v916
        %v918 = vrot.slane %v728, 2
        %v919 = vsel %vm910, %v916, %v918
        %v920 = vrot.slane %v730, 2
        %v921 = vsel %vm910, %v918, %v920
        %v922 = vrot.slane %v732, 2
        %v923 = vsel %vm910, %v920, %v922
        %v924 = vrot.slane %v734, 2
        %v925 = vsel %vm910, %v922, %v924
        %v926 = vrot.slane %v736, 2
        %v927 = vsel %vm910, %v924, %v926
        %v936 = vsel %vm900, %v913, 0.0
        %v937 = vsel %vm901, %v915, 0.0
        %v938 = vsel %vm902, %v917, 0.0
        %v939 = vsel %vm903, %v919, 0.0
        %v940 = vsel %vm904, %v921, 0.0
        %v941 = vsel %vm905, %v923, 0.0
        %v942 = vsel %vm906, %v925, 0.0
        %v943 = vsel %vm907, %v927, 0.0
        %v944 = vsel %vm877, %v746, 0.0
        %v945 = vsel %vm878, %v724, 0.0
        %v946 = vsel %vm879, %v726, 0.0
        %v947 = vsel %vm880, %v728, 0.0
        %v948 = vsel %vm881, %v730, 0.0
        %v949 = vsel %vm882, %v732, 0.0
        %v950 = vsel %vm883, %v734, 0.0
        %v951 = vsel %vm884, %v736, 0.0
        %v953 = vrot.slane %v747, 2
        %v954 = vsel %vm910, %v926, %v953
        %v956 = vsel %vm900, %v915, 0.0
        %v957 = vsel %vm901, %v917, 0.0
        %v958 = vsel %vm902, %v919, 0.0
        %v959 = vsel %vm903, %v921, 0.0
        %v960 = vsel %vm904, %v923, 0.0
        %v961 = vsel %vm905, %v925, 0.0
        %v962 = vsel %vm906, %v927, 0.0
        %v963 = vsel %vm907, %v954, 0.0
        %v964 = vsel %vm877, %v724, 0.0
        %v965 = vsel %vm878, %v726, 0.0
        %v966 = vsel %vm879, %v728, 0.0
        %v967 = vsel %vm880, %v730, 0.0
        %v968 = vsel %vm881, %v732, 0.0
        %v969 = vsel %vm882, %v734, 0.0
        %v970 = vsel %vm883, %v736, 0.0
        %v971 = vsel %vm884, %v747, 0.0
        %v972 = vsel %vm910, %v953, %v911
        %v974 = vsel %vm900, %v917, 0.0
        %v975 = vsel %vm901, %v919, 0.0
        %v976 = vsel %vm902, %v921, 0.0
        %v977 = vsel %vm903, %v923, 0.0
        %v978 = vsel %vm904, %v925, 0.0
        %v979 = vsel %vm905, %v927, 0.0
        %v980 = vsel %vm906, %v954, 0.0
        %v981 = vsel %vm907, %v972, 0.0
        %vm982 = vcmask 1046528
        %v983 = vrot.slane 0.0, 1
        %v984 = vrot.slane %v746, 1
        %v985 = vsel %vm982, %v983, %v984
        %v986 = vrot.slane %v724, 1
        %v987 = vsel %vm982, %v984, %v986
        %v988 = vrot.slane %v726, 1
        %v989 = vsel %vm982, %v986, %v988
        %v990 = vrot.slane %v728, 1
        %v991 = vsel %vm982, %v988, %v990
        %v992 = vrot.slane %v730, 1
        %v993 = vsel %vm982, %v990, %v992
        %v994 = vrot.slane %v732, 1
        %v995 = vsel %vm982, %v992, %v994
        %v996 = vrot.slane %v734, 1
        %v997 = vsel %vm982, %v994, %v996
        %v998 = vrot.slane %v736, 1
        %v999 = vsel %vm982, %v996, %v998
        %1000 = vrot.lane.b32.xlu0 %v985, 2
        %v1001 = vpop.permute.xlu0 %1000
        %1002 = vrot.lane.b32.xlu0 %v987, 2
        %v1003 = vpop.permute.xlu0 %1002
        %1004 = vrot.lane.b32.xlu0 %v989, 2
        %v1005 = vpop.permute.xlu0 %1004
        %1006 = vrot.lane.b32.xlu0 %v991, 2
        %v1007 = vpop.permute.xlu0 %1006
        %1008 = vrot.lane.b32.xlu0 %v993, 2
        %v1009 = vpop.permute.xlu0 %1008
        %1010 = vrot.lane.b32.xlu0 %v995, 2
        %v1011 = vpop.permute.xlu0 %1010
        %1012 = vrot.lane.b32.xlu0 %v997, 2
        %v1013 = vpop.permute.xlu0 %1012
        %1014 = vrot.lane.b32.xlu0 %v999, 2
        %v1015 = vpop.permute.xlu0 %1014
        %1032 = vrot.lane.b32.xlu0 %v936, 4
        %v1033 = vpop.permute.xlu0 %1032
        %1034 = vrot.lane.b32.xlu0 %v937, 4
        %v1035 = vpop.permute.xlu0 %1034
        %1036 = vrot.lane.b32.xlu0 %v938, 4
        %v1037 = vpop.permute.xlu0 %1036
        %1038 = vrot.lane.b32.xlu0 %v939, 4
        %v1039 = vpop.permute.xlu0 %1038
        %1040 = vrot.lane.b32.xlu0 %v940, 4
        %v1041 = vpop.permute.xlu0 %1040
        %1042 = vrot.lane.b32.xlu0 %v941, 4
        %v1043 = vpop.permute.xlu0 %1042
        %1044 = vrot.lane.b32.xlu0 %v942, 4
        %v1045 = vpop.permute.xlu0 %1044
        %1046 = vrot.lane.b32.xlu0 %v943, 4
        %v1047 = vpop.permute.xlu0 %1046
        %1064 = vrot.lane.b32.xlu0 %v944, 6
        %v1065 = vpop.permute.xlu0 %1064
        %1066 = vrot.lane.b32.xlu0 %v945, 6
        %v1067 = vpop.permute.xlu0 %1066
        %1068 = vrot.lane.b32.xlu0 %v946, 6
        %v1069 = vpop.permute.xlu0 %1068
        %1070 = vrot.lane.b32.xlu0 %v947, 6
        %v1071 = vpop.permute.xlu0 %1070
        %1072 = vrot.lane.b32.xlu0 %v948, 6
        %v1073 = vpop.permute.xlu0 %1072
        %1074 = vrot.lane.b32.xlu0 %v949, 6
        %v1075 = vpop.permute.xlu0 %1074
        %1076 = vrot.lane.b32.xlu0 %v950, 6
        %v1077 = vpop.permute.xlu0 %1076
        %1078 = vrot.lane.b32.xlu0 %v951, 6
        %v1079 = vpop.permute.xlu0 %1078
        %v1088 = vrot.slane %v747, 1
        %v1089 = vsel %vm982, %v998, %v1088
        %1090 = vrot.lane.b32.xlu0 %v987, 8
        %v1091 = vpop.permute.xlu0 %1090
        %1092 = vrot.lane.b32.xlu0 %v989, 8
        %v1093 = vpop.permute.xlu0 %1092
        %1094 = vrot.lane.b32.xlu0 %v991, 8
        %v1095 = vpop.permute.xlu0 %1094
        %1096 = vrot.lane.b32.xlu0 %v993, 8
        %v1097 = vpop.permute.xlu0 %1096
        %1098 = vrot.lane.b32.xlu0 %v995, 8
        %v1099 = vpop.permute.xlu0 %1098
        %1100 = vrot.lane.b32.xlu0 %v997, 8
        %v1101 = vpop.permute.xlu0 %1100
        %1102 = vrot.lane.b32.xlu0 %v999, 8
        %v1103 = vpop.permute.xlu0 %1102
        %1104 = vrot.lane.b32.xlu0 %v1089, 8
        %v1105 = vpop.permute.xlu0 %1104
        %1122 = vrot.lane.b32.xlu0 %v956, 10
        %v1123 = vpop.permute.xlu0 %1122
        %1124 = vrot.lane.b32.xlu0 %v957, 10
        %v1125 = vpop.permute.xlu0 %1124
        %1126 = vrot.lane.b32.xlu0 %v958, 10
        %v1127 = vpop.permute.xlu0 %1126
        %1128 = vrot.lane.b32.xlu0 %v959, 10
        %v1129 = vpop.permute.xlu0 %1128
        %1130 = vrot.lane.b32.xlu0 %v960, 10
        %v1131 = vpop.permute.xlu0 %1130
        %1132 = vrot.lane.b32.xlu0 %v961, 10
        %v1133 = vpop.permute.xlu0 %1132
        %1134 = vrot.lane.b32.xlu0 %v962, 10
        %v1135 = vpop.permute.xlu0 %1134
        %1136 = vrot.lane.b32.xlu0 %v963, 10
        %v1137 = vpop.permute.xlu0 %1136
        %1154 = vrot.lane.b32.xlu0 %v964, 12
        %v1155 = vpop.permute.xlu0 %1154
        %1156 = vrot.lane.b32.xlu0 %v965, 12
        %v1157 = vpop.permute.xlu0 %1156
        %1158 = vrot.lane.b32.xlu0 %v966, 12
        %v1159 = vpop.permute.xlu0 %1158
        %1160 = vrot.lane.b32.xlu0 %v967, 12
        %v1161 = vpop.permute.xlu0 %1160
        %1162 = vrot.lane.b32.xlu0 %v968, 12
        %v1163 = vpop.permute.xlu0 %1162
        %1164 = vrot.lane.b32.xlu0 %v969, 12
        %v1165 = vpop.permute.xlu0 %1164
        %1166 = vrot.lane.b32.xlu0 %v970, 12
        %v1167 = vpop.permute.xlu0 %1166
        %1168 = vrot.lane.b32.xlu0 %v971, 12
        %v1169 = vpop.permute.xlu0 %1168
        %v1178 = vsel %vm982, %v1088, %v983
        %1179 = vrot.lane.b32.xlu0 %v989, 14
        %v1180 = vpop.permute.xlu0 %1179
        %1181 = vrot.lane.b32.xlu0 %v991, 14
        %v1182 = vpop.permute.xlu0 %1181
        %1183 = vrot.lane.b32.xlu0 %v993, 14
        %v1184 = vpop.permute.xlu0 %1183
        %1185 = vrot.lane.b32.xlu0 %v995, 14
        %v1186 = vpop.permute.xlu0 %1185
        %1187 = vrot.lane.b32.xlu0 %v997, 14
        %v1188 = vpop.permute.xlu0 %1187
        %1189 = vrot.lane.b32.xlu0 %v999, 14
        %v1190 = vpop.permute.xlu0 %1189
        %1191 = vrot.lane.b32.xlu0 %v1089, 14
        %v1192 = vpop.permute.xlu0 %1191
        %1193 = vrot.lane.b32.xlu0 %v1178, 14
        %v1194 = vpop.permute.xlu0 %1193
        %1211 = vrot.lane.b32.xlu0 %v974, 16
        %v1212 = vpop.permute.xlu0 %1211
        %1213 = vrot.lane.b32.xlu0 %v975, 16
        %v1214 = vpop.permute.xlu0 %1213
        %1215 = vrot.lane.b32.xlu0 %v976, 16
        %v1216 = vpop.permute.xlu0 %1215
        %1217 = vrot.lane.b32.xlu0 %v977, 16
        %v1218 = vpop.permute.xlu0 %1217
        %1219 = vrot.lane.b32.xlu0 %v978, 16
        %v1220 = vpop.permute.xlu0 %1219
        %1221 = vrot.lane.b32.xlu0 %v979, 16
        %v1222 = vpop.permute.xlu0 %1221
        %1223 = vrot.lane.b32.xlu0 %v980, 16
        %v1224 = vpop.permute.xlu0 %1223
        %1225 = vrot.lane.b32.xlu0 %v981, 16
        %v1226 = vpop.permute.xlu0 %1225
        %v1235 = vsel %vm515, 0.0, %v1001
        %v1236 = vsel %vm515, %v885, %v1003
        %v1237 = vsel %vm515, %v886, %v1005
        %v1238 = vsel %vm515, %v887, %v1007
        %v1239 = vsel %vm515, %v888, %v1009
        %v1240 = vsel %vm515, %v889, %v1011
        %v1241 = vsel %vm515, %v890, %v1013
        %v1242 = vsel %vm515, %v891, %v1015
        %vm1243 = vcmask 31744
        %v1244 = vsel %vm1243, %v1235, %v1033
        %v1245 = vsel %vm1243, %v1236, %v1035
        %v1246 = vsel %vm1243, %v1237, %v1037
        %v1247 = vsel %vm1243, %v1238, %v1039
        %v1248 = vsel %vm1243, %v1239, %v1041
        %v1249 = vsel %vm1243, %v1240, %v1043
        %v1250 = vsel %vm1243, %v1241, %v1045
        %v1251 = vsel %vm1243, %v1242, %v1047
        %vm1252 = vcmask 48128
        %v1253 = vsel %vm1252, %v1244, %v1065
        %v1254 = vsel %vm1252, %v1245, %v1067
        %v1255 = vsel %vm1252, %v1246, %v1069
        %v1256 = vsel %vm1252, %v1247, %v1071
        %v1257 = vsel %vm1252, %v1248, %v1073
        %v1258 = vsel %vm1252, %v1249, %v1075
        %v1259 = vsel %vm1252, %v1250, %v1077
        %v1260 = vsel %vm1252, %v1251, %v1079
        %vm1261 = vcmask 64512
        %v1262 = vsel %vm1261, %v1253, %v1091
        %v1263 = vsel %vm1261, %v1254, %v1093
        %v1264 = vsel %vm1261, %v1255, %v1095
        %v1265 = vsel %vm1261, %v1256, %v1097
        %v1266 = vsel %vm1261, %v1257, %v1099
        %v1267 = vsel %vm1261, %v1258, %v1101
        %v1268 = vsel %vm1261, %v1259, %v1103
        %v1269 = vsel %vm1261, %v1260, %v1105
        %vm1270 = vcmask 80896
        %v1271 = vsel %vm1270, %v1262, %v1123
        %v1272 = vsel %vm1270, %v1263, %v1125
        %v1273 = vsel %vm1270, %v1264, %v1127
        %v1274 = vsel %vm1270, %v1265, %v1129
        %v1275 = vsel %vm1270, %v1266, %v1131
        %v1276 = vsel %vm1270, %v1267, %v1133
        %v1277 = vsel %vm1270, %v1268, %v1135
        %v1278 = vsel %vm1270, %v1269, %v1137
        %vm1279 = vcmask 97280
        %v1280 = vsel %vm1279, %v1271, %v1155
        %v1281 = vsel %vm1279, %v1272, %v1157
        %v1282 = vsel %vm1279, %v1273, %v1159
        %v1283 = vsel %vm1279, %v1274, %v1161
        %v1284 = vsel %vm1279, %v1275, %v1163
        %v1285 = vsel %vm1279, %v1276, %v1165
        %v1286 = vsel %vm1279, %v1277, %v1167
        %v1287 = vsel %vm1279, %v1278, %v1169
        %vm1288 = vcmask 113664
        %v1289 = vsel %vm1288, %v1280, %v1180
        %v1290 = vsel %vm1288, %v1281, %v1182
        %v1291 = vsel %vm1288, %v1282, %v1184
        %v1292 = vsel %vm1288, %v1283, %v1186
        %v1293 = vsel %vm1288, %v1284, %v1188
        %v1294 = vsel %vm1288, %v1285, %v1190
        %v1295 = vsel %vm1288, %v1286, %v1192
        %v1296 = vsel %vm1288, %v1287, %v1194
        %v1297 = vsel %vm460, %v1289, %v1212
        %v1298 = vsel %vm460, %v1290, %v1214
        %v1299 = vsel %vm460, %v1291, %v1216
        %v1300 = vsel %vm460, %v1292, %v1218
        %v1301 = vsel %vm460, %v1293, %v1220
        %v1302 = vsel %vm460, %v1294, %v1222
        %v1303 = vsel %vm460, %v1295, %v1224
        %v1304 = vsel %vm460, %v1296, %v1226
        %v1305 = vpack.c.bf16 %v1298, %v1297
        %v1306 = vpack.c.bf16 %v1300, %v1299
        %v1307 = vpack.c.bf16 %v1302, %v1301
        %v1308 = vpack.c.bf16 %v1304, %v1303
        %v1309 = vld [vmem:[%s6] sm:$0xf]
        %v1310 = vld [vmem:[%s6 + $0x4] sm:$0xf]
        %v1311 = vld [vmem:[%s6 + $0x8] sm:$0x1]
        %v1312 = vld [vmem:[%s7] sm:$0x1]
        %v1314 = vperm.slane %v1312, 0
        %v1319 = vunpack.c.l.b16 %v1309
        %v1320 = vunpack.c.l.b16 %v1310
        %v1321 = vunpack.c.l.b16 %v1311
        %v1322 = vpack.c.b16 %v1320, %v1319
        %v1323 = vpack.c.b16 %v1321, %v1321
        %vm1325 = vcmask 146432
        %v1327 = vsel %vm1325, %v1305, 0
        %v1330 = vsel %vm1325, %v1306, 0
        %v1333 = vsel %vm1325, %v1307, 0
        %v1336 = vsel %vm1325, %v1308, 0
        %v1339 = vsel %vm528, %v1323, 0
        %1341 = vmatpush.bf16.msra.mxu0 0
        %1342 = vmatpush.bf16.msra.mxu0 0
        %1343 = vmatpush.bf16.msra.mxu0 0
        %1344 = vmatpush.bf16.msra.mxu0 0
        %1345 = vmatpush.bf16.msra.mxu0 0
        %1346 = vmatpush.bf16.msra.mxu0 0
        %1347 = vmatpush.bf16.msra.mxu0 %v1339
        %1348 = vmatpush.bf16.msra.mxu0 %v1322
        %1349 = vmatmul.bf16.gmra.mxu0 %v1327
        %v1350 = vpop.f32.mrf.mxu0
        %v1351 = vadd.f32 %v1314, %v1350
        %v1352 = vpop.f32.mrf.mxu0
        %v1353 = vadd.f32 %v1314, %v1352
        %1354 = vmatmul.bf16.gmra.mxu0 %v1330
        %v1355 = vpop.f32.mrf.mxu0
        %v1356 = vadd.f32 %v1314, %v1355
        %v1357 = vpop.f32.mrf.mxu0
        %v1358 = vadd.f32 %v1314, %v1357
        %1359 = vmatmul.bf16.gmra.mxu0 %v1333
        %v1360 = vpop.f32.mrf.mxu0
        %v1361 = vadd.f32 %v1314, %v1360
        %v1362 = vpop.f32.mrf.mxu0
        %v1363 = vadd.f32 %v1314, %v1362
        %1364 = vmatmul.bf16.gmra.mxu0 %v1336
        %v1365 = vpop.f32.mrf.mxu0
        %v1366 = vadd.f32 %v1314, %v1365
        %v1367 = vpop.f32.mrf.mxu0
        %v1368 = vadd.f32 %v1314, %v1367
        %1369 = vdwg.mxu0
        %v1370 = vmax.f32 %v1351, 0.0
        %v1371 = vmax.f32 %v1353, 0.0
        %v1372 = vmax.f32 %v1356, 0.0
        %v1373 = vmax.f32 %v1358, 0.0
        %v1374 = vmax.f32 %v1361, 0.0
        %v1375 = vmax.f32 %v1363, 0.0
        %v1376 = vmax.f32 %v1366, 0.0
        %v1377 = vmax.f32 %v1368, 0.0
        %v1378 = vpack.c.bf16 %v1371, %v1370
        %v1379 = vpack.c.bf16 %v1373, %v1372
        %v1380 = vpack.c.bf16 %v1375, %v1374
        %v1381 = vpack.c.bf16 %v1377, %v1376
        %v1382 = vld [vmem:[%s8] sm:$0x1]
        %v1383 = vld [vmem:[%s9] sm:$0x1]
        %v1385 = vperm.slane %v1383, 0
        %v1388 = vsel %vm515, %v1378, 0
        %v1391 = vsel %vm515, %v1379, 0
        %v1394 = vsel %vm515, %v1380, 0
        %v1397 = vsel %vm515, %v1381, 0
        %v1400 = vsel %vm528, %v1382, 0
        %1402 = vmatpush.bf16.msra.mxu0 0
        %1403 = vmatpush.bf16.msra.mxu0 0
        %1404 = vmatpush.bf16.msra.mxu0 0
        %1405 = vmatpush.bf16.msra.mxu0 0
        %1406 = vmatpush.bf16.msra.mxu0 0
        %1407 = vmatpush.bf16.msra.mxu0 0
        %1408 = vmatpush.bf16.msra.mxu0 0
        %1409 = vmatpush.bf16.msra.mxu0 %v1400
        %1410 = vmatmul.bf16.gmra.mxu0 %v1388
        %v1411 = vpop.f32.mrf.mxu0
        %v1412 = vadd.f32 %v1385, %v1411
        %v1413 = vpop.f32.mrf.mxu0
        %v1414 = vadd.f32 %v1385, %v1413
        %1415 = vmatmul.bf16.gmra.mxu0 %v1391
        %v1416 = vpop.f32.mrf.mxu0
        %v1417 = vadd.f32 %v1385, %v1416
        %v1418 = vpop.f32.mrf.mxu0
        %v1419 = vadd.f32 %v1385, %v1418
        %1420 = vmatmul.bf16.gmra.mxu0 %v1394
        %v1421 = vpop.f32.mrf.mxu0
        %v1422 = vadd.f32 %v1385, %v1421
        %v1423 = vpop.f32.mrf.mxu0
        %v1424 = vadd.f32 %v1385, %v1423
        %1425 = vmatmul.bf16.gmra.mxu0 %v1397
        %v1426 = vpop.f32.mrf.mxu0
        %v1427 = vadd.f32 %v1385, %v1426
        %v1428 = vpop.f32.mrf.mxu0
        %v1429 = vadd.f32 %v1385, %v1428
        %1430 = vdwg.mxu0
        %v1431 = vadd.f32 %v1412, %v641
        %v1432 = vadd.f32 %v1414, %v642
        %v1433 = vadd.f32 %v1417, %v643
        %v1434 = vadd.f32 %v1419, %v644
        %v1435 = vadd.f32 %v1422, %v645
        %v1436 = vadd.f32 %v1424, %v646
        %v1437 = vadd.f32 %v1427, %v647
        %v1438 = vadd.f32 %v1429, %v648
        %v1439 = vsel %vm460, %v1431, 0.0
        %v1440 = vsel %vm460, %v1432, 0.0
        %v1441 = vadd.f32 %v1439, %v1440
        %v1442 = vsel %vm460, %v1433, 0.0
        %v1443 = vadd.f32 %v1441, %v1442
        %v1444 = vsel %vm460, %v1434, 0.0
        %v1445 = vadd.f32 %v1443, %v1444
        %v1446 = vsel %vm460, %v1435, 0.0
        %v1447 = vadd.f32 %v1445, %v1446
        %v1448 = vsel %vm460, %v1436, 0.0
        %v1449 = vadd.f32 %v1447, %v1448
        %v1450 = vsel %vm460, %v1437, 0.0
        %v1451 = vadd.f32 %v1449, %v1450
        %v1452 = vsel %vm460, %v1438, 0.0
        %v1453 = vadd.f32 %v1451, %v1452
        %v1454 = vrot.slane %v1453, 4
        %v1455 = vadd.f32 %v1453, %v1454
        %v1456 = vrot.slane %v1455, 2
        %v1457 = vadd.f32 %v1455, %v1456
        %v1458 = vrot.slane %v1457, 1
        %v1459 = vadd.f32 %v1457, %v1458
        %v1460 = vrcp.pop 64.0
        %v1461 = vmul.f32 64.0, %v1460
        %v1462 = vsub.f32 1.0, %v1461
        %v1463 = vmul.f32 %v1460, %v1462
        %v1464 = vadd.f32 %v1460, %v1463
        %vm1465 = vweird.f32 %v1460
        %v1466 = vsel %vm1465, %v1460, %v1464
        %v1467 = vmul.f32 %v1459, %v1466
        %v1468 = vpack.c.bf16 %v1467, %v1467
        %v1469 = vld [vmem:[%s10] sm:$0xf]
        %v1470 = vld [vmem:[%s10 + $0x4] sm:$0xf]
        %v1471 = vld [vmem:[%s11] sm:$0x1]
        %v1474 = vunpack.c.l.b16 %v1469
        %v1475 = vunpack.c.l.b16 %v1470
        %v1476 = vpack.c.b16 %v1475, %v1474
        %v1479 = vsel %vm460, %v1468, 0
        %1481 = vmatpush.bf16.msra.mxu0 0
        %1482 = vmatpush.bf16.msra.mxu0 0
        %1483 = vmatpush.bf16.msra.mxu0 0
        %1484 = vmatpush.bf16.msra.mxu0 0
        %1485 = vmatpush.bf16.msra.mxu0 0
        %1486 = vmatpush.bf16.msra.mxu0 0
        %1487 = vmatpush.bf16.msra.mxu0 0
        %1488 = vmatpush.bf16.msra.mxu0 %v1476
        %1489 = vmatmul.bf16.gmra.mxu0 %v1479
        %v1490 = vpop.f32.mrf.mxu0
        %v1491 = vadd.f32 %v1471, %v1490
        %v1492 = vpop.f32.mrf.mxu0
        %1493 = vdwg.mxu0
        %vm1494 = vcmask 8192
        %v1495 = vsel %vm1494, %v1491, -inf
        %1496 = vmax.xlane.f32.xlu0 %v1495
        %v1497 = vpop.xlane.xlu0 %1496
        %v1498 = vsub.f32 %v1491, %v1497
        %v1499 = vmul.f32 %v1498, 1.442695
        %v1500 = vpow.pop %v1499
        %v1501 = vsel %vm1494, %v1500, 0.0
        %1502 = vadd.xlane.f32.xlu0 %v1501
        %v1503 = vpop.xlane.xlu0 %1502
        %v1504 = vrcp.pop %v1503
        %v1505 = vmul.f32 %v1503, %v1504
        %v1506 = vsub.f32 1.0, %v1505
        %v1507 = vmul.f32 %v1504, %v1506
        %v1508 = vadd.f32 %v1504, %v1507
        %vm1509 = vweird.f32 %v1503
        %vm1510 = vweird.f32 %v1504
        %vm1511 = vmor %vm1509, %vm1510
        %v1512 = vsel %vm1511, %v1504, %v1508
        %v1513 = vand.u32 2147483647, %v1503
        %vm1514 = vcmp.eq.f32.partialorder %v1513, 8.507059e+37
        %v1515 = vand.u32 %v1503, 2147483648
        %v1516 = vor.u32 1.1754944e-38, %v1515
        %v1517 = vsel %vm1514, %v1516, %v1512
        %v1518 = vmul.f32 %v1500, %v1517
        %1519 = vst.msk [vmem:[%s405] sm:$0x1] %vm1494, %v1518
        %s1520 = sand.u32 %s291, 1
        %s1521 = scalar_lea.sflag [#allocation3], %s1520
        %s1522 = sand.u32 %s291, 1
        %s1523 = scalar_lea.vmem [#allocation2], %s1522
        // Predicated region
        $region69: #{tpu_custom_call.1} parent=67 // pred_check
          %p1524 = pneg %p301
        $region70: #{tpu_custom_call.1} parent=67 // pred_check_branch
          %1526 = sbr.rel (%p1524) target = $region72
        $region71: #{tpu_custom_call.1} parent=67 // pred_region
          %1528 = vsyncadd %s1521, 0
          %s1529 = scalar_lea.hbm %s12, %s26
          %s1531 = sshll.u32 %s1523, 4
          %s1532 = int_to_ptr.vmem [resolvable:$true] %s1531
          %s1533 = sshll.u32 %s1529, 4
          %s1534 = int_to_ptr.hbm [resolvable:$true] %s1533
          %1536 = dma.vmem_to_hbm [thread:$0]  %s1532, 16, %s1534, %s1521
        $region72: #{tpu_custom_call.1} parent=67 // pred_fallthru
          _
      $region68: #{tpu_custom_call.1} parent=5 // pred_fallthru
        _
      %p1537 = scmp.le.s32.totalorder 2, %s21
      // Predicated region
      $region73: #{tpu_custom_call.1} parent=5 // pred_check
        %p1538 = pneg %p1537
      $region74: #{tpu_custom_call.1} parent=5 // pred_check_branch
        %1540 = sbr.rel (%p1538) target = $region76
      $region75: #{tpu_custom_call.1} parent=5 // pred_region
        %s1541 = ssub.s32 %s21, 2
        // Predicated region
        $region77: #{tpu_custom_call.1} parent=75 // pred_check
          %p1542 = pneg %p307
        $region78: #{tpu_custom_call.1} parent=75 // pred_check_branch
          %1544 = sbr.rel (%p1542) target = $region80
        $region79: #{tpu_custom_call.1} parent=75 // pred_region
          %s1545 = sand.u32 %s292, 1
          %s1546 = scalar_lea.sflag [#allocation3], %s1545
          %s1547 = sand.u32 %s292, 1
          %s1548 = scalar_lea.vmem [#allocation2], %s1547
          %1550 = dma.done %s1546, 16
        $region80: #{tpu_custom_call.1} parent=75 // pred_fallthru
          _
      $region76: #{tpu_custom_call.1} parent=5 // pred_fallthru
        _
    $region6: #{tpu_custom_call.1} parent=1 // loop_footer
      %s25 = sadd.s32 1, %s21
    $region7: #{tpu_custom_call.1} parent=1 // loop_footer_branch
      %20 = sbr.rel target = $region3
    $region8: #{tpu_custom_call.1} parent=1 // loop_exit
      _
    %1551 = vsyncpa [#allocation3], 1
    %s1552 = scalar_lea.sflag [#allocation3], 1
    %1553 = vsyncpa %s1552, 1

</llo_original>
